<compile_context>
chip_gen: v7x
topology: tpu7x:2x2x1
jax: 0.10.0
libtpu: 0.0.40
codegen_flags: <defaults>
</compile_context>

<pallas_src>
import functools

import jax
import jax.numpy as jnp
from jax.experimental import pallas as pl
from jax.experimental.pallas import tpu as pltpu


def _round_up(x, m):
    return ((x + m - 1) // m) * m


def _perm_ifog(x, H):
    """Permute the trailing 4H gate axis from PyTorch (i,f,g,o) to (i,f,o,g)."""
    return jnp.concatenate(
        [x[..., 0 * H:1 * H], x[..., 1 * H:2 * H],
         x[..., 3 * H:4 * H], x[..., 2 * H:3 * H]], axis=-1)


# ----------------------------------------------------------------------------
# Pallas kernel: fused fwd+bwd LSTM recurrence over one (batch block, time chunk)
# ----------------------------------------------------------------------------
def _bilstm_chunk_kernel(len_ref, gxf_ref, gxb_ref, wbig_ref,
                         outf_ref, outb_ref, h_ref, c_ref,
                         *, hidden, tc, unroll):
    H = hidden
    g = pl.program_id(1)                     # time-chunk index (serial axis)
    nc = pl.num_programs(1)

    @pl.when(g == 0)                         # new batch block -> reset state
    def _():
        h_ref[...] = jnp.zeros_like(h_ref)   # (Bb, 2H) bf16   [h_f | h_b]
        c_ref[...] = jnp.zeros_like(c_ref)   # (Bb, 2H) f32    [c_f | c_b]

    lens = len_ref[...]                      # (Bb, 1) int32
    w_big = wbig_ref[...]                    # (2H, 8H) bf16 block-diagonal
    Bb = lens.shape[0]
    t0_f = g * tc                            # first global t of the fwd chunk
    t0_b = (nc - 1 - g) * tc                 # first global t of the bwd chunk

    def step(s, carry):
        p = tc - 1 - s                       # bwd within-chunk position (descending t)
        t_f = t0_f + s
        t_b = t0_b + p

        h = h_ref[...]                       # bf16 (Bb, 2H)
        c = c_ref[...]                       # f32  (Bb, 2H)

        # ONE fused MXU dot for both directions (f32 accumulation).
        dot_out = jnp.dot(h, w_big, preferred_element_type=jnp.float32)   # (Bb, 8H)
        gates_f = dot_out[:, :4 * H] + gxf_ref[s].astype(jnp.float32)     # [i,f,o,g]
        gates_b = dot_out[:, 4 * H:] + gxb_ref[p].astype(jnp.float32)     # [i,f,o,g]

        # Wide activations: one sigmoid over (Bb,6H), one tanh over (Bb,2H).
        sig = jax.nn.sigmoid(jnp.concatenate(
            [gates_f[:, :3 * H], gates_b[:, :3 * H]], axis=-1))
        g_in = jnp.tanh(jnp.concatenate(
            [gates_f[:, 3 * H:], gates_b[:, 3 * H:]], axis=-1))           # [g_f|g_b]

        i_fb = jnp.concatenate([sig[:, 0 * H:1 * H], sig[:, 3 * H:4 * H]], axis=-1)
        f_fb = jnp.concatenate([sig[:, 1 * H:2 * H], sig[:, 4 * H:5 * H]], axis=-1)
        o_fb = jnp.concatenate([sig[:, 2 * H:3 * H], sig[:, 5 * H:6 * H]], axis=-1)

        c_new = f_fb * c + i_fb * g_in                                    # (Bb, 2H) f32
        h_new = o_fb * jnp.tanh(c_new)                                    # (Bb, 2H) f32

        live_f = t_f < lens                  # (Bb, 1) bool -- packed-seq mask
        live_b = t_b < lens
        h_new_c = h_new.astype(h_ref.dtype)

        # Freeze state past sequence end (per direction), zero padded outputs.
        h_ref[...] = jnp.concatenate(
            [jnp.where(live_f, h_new_c[:, :H], h[:, :H]),
             jnp.where(live_b, h_new_c[:, H:], h[:, H:])], axis=-1)
        c_ref[...] = jnp.concatenate(
            [jnp.where(live_f, c_new[:, :H], c[:, :H]),
             jnp.where(live_b, c_new[:, H:], c[:, H:])], axis=-1)
        outf_ref[s] = jnp.where(live_f, h_new[:, :H], 0.0).astype(outf_ref.dtype)
        outb_ref[p] = jnp.where(live_b, h_new[:, H:], 0.0).astype(outb_ref.dtype)
        return carry

    jax.lax.fori_loop(0, tc, step, 0, unroll=unroll)


# ----------------------------------------------------------------------------
# Hoisted input projection: one big bf16 GEMM per direction (f32 accumulation)
# ----------------------------------------------------------------------------
def _input_gates(parts, wih, bias, t_pad, *, compute_dtype, store_dtype):
    """sum_i parts[i] @ wih[row-slice_i] + bias, padded along time to t_pad."""
    T = parts[0].shape[0]
    acc, off = None, 0
    for p in parts:
        d = p.shape[-1]
        term = jnp.einsum('tbd,dg->tbg',
                          p.astype(compute_dtype),
                          wih[off:off + d].astype(compute_dtype),
                          preferred_element_type=jnp.float32)
        acc = term if acc is None else acc + term
        off += d
    acc = (acc + bias[None, None, :].astype(jnp.float32)).astype(store_dtype)
    if t_pad > T:
        acc = jnp.pad(acc, ((0, t_pad - T), (0, 0), (0, 0)))
    return acc


# ----------------------------------------------------------------------------
# One bidirectional LSTM layer = one pallas_call (both directions fused)
# ----------------------------------------------------------------------------
def _bilstm_layer_pallas(parts, lengths_b1, wih_f, whh_f, b_f, wih_b, whh_b, b_b,
                         *, time_chunk, batch_block):
    T, Bp, _ = parts[0].shape
    H = whh_f.shape[0]
    tc = max(1, min(time_chunk, T))
    nc = pl.cdiv(T, tc)
    t_pad = nc * tc
    Bb = batch_block
    nb = Bp // Bb

    # Gate-column permutation (i,f,g,o -> i,f,o,g) for wide contiguous activations.
    wih_f_r, b_f_r, whh_f_r = _perm_ifog(wih_f, H), _perm_ifog(b_f, H), _perm_ifog(whh_f, H)
    wih_b_r, b_b_r, whh_b_r = _perm_ifog(wih_b, H), _perm_ifog(b_b, H), _perm_ifog(whh_b, H)

    # Hoisted input projection, stored bf16 (halves the dominant HBM->VMEM stream).
    gx_f = _input_gates(parts, wih_f_r, b_f_r, t_pad,
                        compute_dtype=jnp.bfloat16, store_dtype=jnp.bfloat16)
    gx_b = _input_gates(parts, wih_b_r, b_b_r, t_pad,
                        compute_dtype=jnp.bfloat16, store_dtype=jnp.bfloat16)

    # Block-diagonal recurrent weight: one (B,2H)x(2H,8H) MXU dot per timestep.
    zeros = jnp.zeros_like(whh_f_r)
    w_big = jnp.concatenate(
        [jnp.concatenate([whh_f_r, zeros], axis=1),
         jnp.concatenate([zeros, whh_b_r], axis=1)], axis=0).astype(jnp.bfloat16)

    unroll = min(8, tc)                      # partial unroll keeps vreg pressure bounded
    kernel = functools.partial(_bilstm_chunk_kernel, hidden=H, tc=tc, unroll=unroll)

    # VMEM footprint (double-buffered bf16 gate streams, f32 outputs, weights, state).
    est = (2 * 2 * tc * Bb * 4 * H * 2
           + 2 * 2 * tc * Bb * H * 4
           + 2 * (2 * H) * (8 * H) * 2
           + Bb * 2 * H * (2 + 4) + Bb * 8)
    vmem_limit = int(min(max(32 << 20, 4 * est), 48 << 20))   # <=48MiB: fits v7x's 64MiB

    out_f, out_b = pl.pallas_call(
        kernel,
        out_shape=(jax.ShapeDtypeStruct((t_pad, Bp, H), jnp.float32),
                   jax.ShapeDtypeStruct((t_pad, Bp, H), jnp.float32)),
        grid_spec=pltpu.PrefetchScalarGridSpec(
            num_scalar_prefetch=0,
            grid=(nb, nc),                                               # (parallel, serial)
            in_specs=[
                pl.BlockSpec((Bb, 1), lambda b, g: (b, 0)),              # lengths
                pl.BlockSpec((tc, Bb, 4 * H), lambda b, g: (g, b, 0)),   # fwd gates (bf16)
                pl.BlockSpec((tc, Bb, 4 * H), lambda b, g: (nc - 1 - g, b, 0)),  # bwd gates
                pl.BlockSpec((2 * H, 8 * H), lambda b, g: (0, 0)),       # block-diag W_hh
            ],
            out_specs=(
                pl.BlockSpec((tc, Bb, H), lambda b, g: (g, b, 0)),            # fwd hidden
                pl.BlockSpec((tc, Bb, H), lambda b, g: (nc - 1 - g, b, 0)),   # bwd hidden
            ),
            scratch_shapes=[pltpu.VMEM((Bb, 2 * H), jnp.bfloat16),   # h_fb (bf16)
                            pltpu.VMEM((Bb, 2 * H), jnp.float32)],   # c_fb (f32)
        ),
        compiler_params=pltpu.CompilerParams(
            dimension_semantics=("parallel", "arbitrary"),
            vmem_limit_bytes=vmem_limit,
        ),
    )(lengths_b1, gx_f, gx_b, w_big)
    return out_f[:T], out_b[:T]


def bilstm_encoder_pallas(inputs_btd, lengths, lstm_params, *, time_chunk=16,
                          batch_block=None):
    """BiLSTMEncoder.forward equivalent. inputs (B,T,E), lengths (B,) -> (B,T,2H)."""
    B, _, _ = inputs_btd.shape
    if batch_block is None:
        Bp = _round_up(B, 8)
        Bb = Bp
    else:
        if batch_block % 16 != 0:
            raise ValueError("batch_block must be a multiple of 16 (bf16 tile alignment)")
        Bb = batch_block
        Bp = _round_up(B, Bb)
    x = jnp.pad(inputs_btd, ((0, Bp - B), (0, 0), (0, 0)))
    lens_p = jnp.pad(lengths.astype(jnp.int32), (0, Bp - B)).reshape(Bp, 1)

    parts = [jnp.transpose(x, (1, 0, 2))]                   # one transpose to time-major
    for layer_params in lstm_params:
        parts = list(_bilstm_layer_pallas(parts, lens_p, *layer_params,
                                          time_chunk=time_chunk, batch_block=Bb))
    out = jnp.concatenate(parts, axis=-1)                   # single concat at the end
    return jnp.transpose(out, (1, 0, 2))[:B]                # batch-first, unpad batch


# ----------------------------------------------------------------------------
# Pure-JAX references (same packed-sequence semantics)
# ----------------------------------------------------------------------------
def _lstm_dir_scan_ref(gx_tbg, lengths, whh, *, reverse, recur_dtype, gate_order):
    T, B, _ = gx_tbg.shape
    H = whh.shape[0]
    whh_c = whh.astype(recur_dtype)
    ts = jnp.arange(T)[::-1] if reverse else jnp.arange(T)

    def step(carry, t):
        h, c = carry
        gates = jnp.dot(h.astype(recur_dtype), whh_c,
                        preferred_element_type=jnp.float32) + gx_tbg[t].astype(jnp.float32)
        if gate_order == 'ifog':
            i, f, o, g = jnp.split(gates, 4, axis=-1)
        else:  # PyTorch native i,f,g,o
            i, f, g, o = jnp.split(gates, 4, axis=-1)
        c_new = jax.nn.sigmoid(f) * c + jax.nn.sigmoid(i) * jnp.tanh(g)
        h_new = jax.nn.sigmoid(o) * jnp.tanh(c_new)
        live = (t < lengths)[:, None]
        h = jnp.where(live, h_new, h)
        c = jnp.where(live, c_new, c)
        return (h, c), jnp.where(live, h_new, 0.0)

    init = (jnp.zeros((B, H), jnp.float32), jnp.zeros((B, H), jnp.float32))
    _, outs = jax.lax.scan(step, init, ts)
    return outs[::-1] if reverse else outs


def bilstm_encoder_ref(inputs_btd, lengths, lstm_params, *, match_pallas=True):
    _, T, _ = inputs_btd.shape
    lengths = lengths.astype(jnp.int32)
    parts = [jnp.transpose(inputs_btd, (1, 0, 2))]
    for (wih_f, whh_f, b_f, wih_b, whh_b, b_b) in lstm_params:
        H = whh_f.shape[0]
        if match_pallas:   # same gate order / bf16 rounding as the Pallas path
            wih_f, b_f, whh_f = _perm_ifog(wih_f, H), _perm_ifog(b_f, H), _perm_ifog(whh_f, H)
            wih_b, b_b, whh_b = _perm_ifog(wih_b, H), _perm_ifog(b_b, H), _perm_ifog(whh_b, H)
            cdt = sdt = rdt = jnp.bfloat16
            order = 'ifog'
        else:
            cdt = sdt = rdt = jnp.float32
            order = 'ifgo'
        gx_f = _input_gates(parts, wih_f, b_f, T, compute_dtype=cdt, store_dtype=sdt)
        gx_b = _input_gates(parts, wih_b, b_b, T, compute_dtype=cdt, store_dtype=sdt)
        out_f = _lstm_dir_scan_ref(gx_f, lengths, whh_f, reverse=False,
                                   recur_dtype=rdt, gate_order=order)
        out_b = _lstm_dir_scan_ref(gx_b, lengths, whh_b, reverse=True,
                                   recur_dtype=rdt, gate_order=order)
        parts = [out_f, out_b]
    return jnp.transpose(jnp.concatenate(parts, axis=-1), (1, 0, 2))


# ----------------------------------------------------------------------------
# Rest of HyperModel.forward (tiny attention / split+pad / classifier) in JAX
# ----------------------------------------------------------------------------
def attention_pool(values, score_inputs, lengths, w, b):
    """SelfAttention / SelfAttention_metaphors forward (eval: dropout=identity)."""
    T = values.shape[1]
    scores = jnp.tanh(score_inputs @ w + b)[..., 0]        # Linear -> Tanh -> squeeze
    scores = jax.nn.softmax(scores, axis=-1)
    mask = (jnp.arange(T)[None, :] < lengths[:, None]).astype(scores.dtype)
    masked = scores * mask
    scores = masked / masked.sum(-1, keepdims=True)
    weighted = values * scores[..., None]
    return weighted.sum(1), scores, weighted


def split_and_pad_docs(x_sd, doc_lengths_list):
    """torch.split + pad_sequence(batch_first=True) equivalent (static lengths)."""
    t_doc = max(doc_lengths_list)
    docs, off = [], 0
    for n in doc_lengths_list:
        docs.append(jnp.pad(x_sd[off:off + n], ((0, t_doc - n), (0, 0))))
        off += n
    return jnp.stack(docs, axis=0)


def hyper_model_forward(meta_pred, predicted, squezeed_lengths, doc_lengths_list,
                        params, encoder_fn):
    # sentence level: metaphor-scored attention, then sentence self-attention
    _, _, weighted = attention_pool(predicted, meta_pred, squezeed_lengths,
                                    params['w_meta'], params['b_meta'])
    averaged_docs, _, _ = attention_pool(weighted, weighted, squezeed_lengths,
                                         params['w_sent'], params['b_sent'])
    # regroup sentences into documents and pad
    predicted_docs = split_and_pad_docs(averaged_docs, doc_lengths_list)
    doc_lengths = jnp.asarray(doc_lengths_list, jnp.int32)
    # document-level BiLSTM encoder (Pallas kernel)
    out_embedding = encoder_fn(predicted_docs, doc_lengths, params['lstm'])
    # document self-attention + classifier (Metaphor: Linear + log_softmax)
    prediction, _, _ = attention_pool(out_embedding, out_embedding, doc_lengths,
                                      params['w_doc'], params['b_doc'])
    logits = prediction @ params['w_cls'] + params['b_cls']
    return jax.nn.log_softmax(logits, axis=-1)


def init_hyper_params(key, hidden_dim, layers, num_classes):
    H = hidden_dim

    def uni(k, shape, fan_in):
        lim = fan_in ** -0.5
        return jax.random.uniform(k, shape, jnp.float32, -lim, lim)

    keys = iter(jax.random.split(key, 64))
    params = {
        'w_meta': uni(next(keys), (2, 1), 2), 'b_meta': uni(next(keys), (1,), 2),
        'w_sent': uni(next(keys), (2 * H, 1), 2 * H), 'b_sent': uni(next(keys), (1,), 2 * H),
        'w_doc': uni(next(keys), (2 * H, 1), 2 * H), 'b_doc': uni(next(keys), (1,), 2 * H),
        'w_cls': uni(next(keys), (2 * H, num_classes), 2 * H),
        'b_cls': uni(next(keys), (num_classes,), 2 * H),
    }
    lstm = []
    for _layer in range(layers):
        d_in = 2 * H                      # embed_dim = 2*hidden_dim, and 2H after layer 0
        dir_p = []
        for _ in range(2):                # forward, backward
            wih = uni(next(keys), (d_in, 4 * H), H)      # = PyTorch weight_ih.T (i,f,g,o)
            whh = uni(next(keys), (H, 4 * H), H)         # = PyTorch weight_hh.T (i,f,g,o)
            b_ih = uni(next(keys), (4 * H,), H)
            b_hh = uni(next(keys), (4 * H,), H)
            dir_p += [wih, whh, b_ih + b_hh]
        lstm.append(tuple(dir_p))
    params['lstm'] = lstm
    return params


if __name__ == "__main__":
    hidden_dim, layers, num_classes = 32, 2, 3
    doc_lengths_list = [4, 3]                 # sentences per document (2 docs)
    n_sent = sum(doc_lengths_list)            # 7 sentences total
    tokens = 8                                # padded tokens per sentence

    key = jax.random.PRNGKey(0)
    key, k_meta, k_pred = jax.random.split(key, 3)
    meta_pred = jax.random.normal(k_meta, (n_sent, tokens, 2), jnp.float32)
    predicted = jax.random.normal(k_pred, (n_sent, tokens, 2 * hidden_dim), jnp.float32)
    squezeed_lengths = jnp.array([8, 5, 7, 3, 8, 6, 4], jnp.int32)
    params = init_hyper_params(key, hidden_dim, layers, num_classes)

    # --- check 1: multi-time-chunk grid path, single batch block --------------
    x = jax.random.normal(jax.random.PRNGKey(1), (2, 9, 2 * hidden_dim), jnp.float32)
    lens = jnp.array([9, 5], jnp.int32)
    enc_pallas = jax.block_until_ready(
        bilstm_encoder_pallas(x, lens, params['lstm'], time_chunk=4))
    enc_match = bilstm_encoder_ref(x, lens, params['lstm'], match_pallas=True)
    enc_f32 = bilstm_encoder_ref(x, lens, params['lstm'], match_pallas=False)
    assert enc_pallas.shape == (2, 9, 2 * hidden_dim), enc_pallas.shape
    assert bool(jnp.all(jnp.isfinite(enc_pallas)))
    assert bool(jnp.allclose(enc_pallas, enc_match, atol=3e-3, rtol=3e-3)), \
        "Pallas BiLSTM mismatch vs precision-matched JAX reference"
    assert bool(jnp.allclose(enc_pallas, enc_f32, atol=1e-1, rtol=1e-1)), \
        "bf16 recurrence drifted too far from the f32 reference"

    # --- check 2: multi batch-block path (parallel grid axis, v7x megacore) ---
    xb = jax.random.normal(jax.random.PRNGKey(2), (20, 9, 2 * hidden_dim), jnp.float32)
    lensb = jax.random.randint(jax.random.PRNGKey(3), (20,), 1, 10).astype(jnp.int32)
    encb_pallas = jax.block_until_ready(
        bilstm_encoder_pallas(xb, lensb, params['lstm'], time_chunk=4, batch_block=16))
    encb_match = bilstm_encoder_ref(xb, lensb, params['lstm'], match_pallas=True)
    assert bool(jnp.all(jnp.isfinite(encb_pallas)))
    assert bool(jnp.allclose(encb_pallas, encb_match, atol=3e-3, rtol=3e-3)), \
        "Pallas BiLSTM mismatch on the batch-blocked (parallel axis) path"

    # --- full HyperModel forward: Pallas LSTM vs JAX reference LSTM -----------
    out_pallas = hyper_model_forward(meta_pred, predicted, squezeed_lengths,
                                     doc_lengths_list, params,
                                     encoder_fn=bilstm_encoder_pallas)
    out_ref = hyper_model_forward(meta_pred, predicted, squezeed_lengths,
                                  doc_lengths_list, params,
                                  encoder_fn=functools.partial(
                                      bilstm_encoder_ref, match_pallas=True))
    out_pallas = jax.block_until_ready(out_pallas)
    assert out_pallas.shape == (len(doc_lengths_list), num_classes), out_pallas.shape
    assert bool(jnp.all(jnp.isfinite(out_pallas)))
    assert bool(jnp.allclose(out_pallas, out_ref, atol=3e-3, rtol=3e-3)), \
        "HyperModel output mismatch vs JAX reference"

    print("KERNEL_OK")
</pallas_src>

<mosaic_0001>
module attributes {stable_mosaic.version = 11 : i64} {
  func.func @_bilstm_chunk_kernel(%arg0: i32, %arg1: i32, %arg2: memref<8x1xi32, #tpu.memory_space<vmem>>, %arg3: memref<4x8x128xbf16, #tpu.memory_space<vmem>>, %arg4: memref<4x8x128xbf16, #tpu.memory_space<vmem>>, %arg5: memref<64x256xbf16, #tpu.memory_space<vmem>>, %arg6: memref<4x8x32xf32, #tpu.memory_space<vmem>>, %arg7: memref<4x8x32xf32, #tpu.memory_space<vmem>>, %arg8: memref<8x64xbf16, #tpu.memory_space<vmem>>, %arg9: memref<8x64xf32, #tpu.memory_space<vmem>>) attributes {dimension_semantics = [#tpu.dimension_semantics<parallel>, #tpu.dimension_semantics<arbitrary>], iteration_bounds = array<i64: 1, 3>, scalar_prefetch = 0 : i64, scratch_operands = 2 : i64, tpu.core_type = #tpu.core_type<tc>, window_params = [{transform_indices = @transform_0, window_bounds = array<i64: 8, 1>}, {transform_indices = @transform_1, window_bounds = array<i64: 4, 8, 128>}, {transform_indices = @transform_2, window_bounds = array<i64: 4, 8, 128>}, {pipeline_mode = #tpu.pipeline_mode<synchronous>, transform_indices = @transform_3, window_bounds = array<i64: 64, 256>}, {transform_indices = @transform_4, window_bounds = array<i64: 4, 8, 32>}, {transform_indices = @transform_5, window_bounds = array<i64: 4, 8, 32>}]} {
    %c0_i32 = arith.constant 0 : i32
    %0 = arith.cmpi eq, %arg1, %c0_i32 : i32
    %1 = arith.extui %0 : i1 to i32
    %c0_i32_0 = arith.constant 0 : i32
    %2 = arith.cmpi ne, %1, %c0_i32_0 : i32
    scf.if %2 {
      %cst_91 = arith.constant 0.000000e+00 : bf16
      %372 = vector.broadcast %cst_91 : bf16 to vector<8x64xbf16>
      %c0_92 = arith.constant 0 : index
      %c0_93 = arith.constant 0 : index
      %373 = vector.load %arg8[%c0_92, %c0_93] : memref<8x64xbf16, #tpu.memory_space<vmem>>, vector<8x64xbf16>
      tpu.vector_store %arg8[%c0_92, %c0_93], %372 {strides = array<i32>} : memref<8x64xbf16, #tpu.memory_space<vmem>>, vector<8x64xbf16>,
      %cst_94 = arith.constant 0.000000e+00 : f32
      %374 = vector.broadcast %cst_94 : f32 to vector<8x64xf32>
      %c0_95 = arith.constant 0 : index
      %c0_96 = arith.constant 0 : index
      %375 = vector.load %arg9[%c0_95, %c0_96] : memref<8x64xf32, #tpu.memory_space<vmem>>, vector<8x64xf32>
      tpu.vector_store %arg9[%c0_95, %c0_96], %374 {strides = array<i32>} : memref<8x64xf32, #tpu.memory_space<vmem>>, vector<8x64xf32>,
    } else {
    }
    %c0 = arith.constant 0 : index
    %c0_1 = arith.constant 0 : index
    %3 = vector.load %arg2[%c0, %c0_1] : memref<8x1xi32, #tpu.memory_space<vmem>>, vector<8x1xi32>
    %c0_2 = arith.constant 0 : index
    %c0_3 = arith.constant 0 : index
    %4 = vector.load %arg5[%c0_2, %c0_3] : memref<64x256xbf16, #tpu.memory_space<vmem>>, vector<64x256xbf16>
    %c4_i32 = arith.constant 4 : i32
    %5 = arith.muli %arg1, %c4_i32 : i32
    %c2_i32 = arith.constant 2 : i32
    %6 = arith.subi %c2_i32, %arg1 : i32
    %c4_i32_4 = arith.constant 4 : i32
    %7 = arith.muli %6, %c4_i32_4 : i32
    %c0_i32_5 = arith.constant 0 : i32
    %c3_i32 = arith.constant 3 : i32
    %8 = arith.subi %c3_i32, %c0_i32_5 : i32
    %9 = arith.addi %5, %c0_i32_5 : i32
    %10 = arith.addi %7, %8 : i32
    %c0_6 = arith.constant 0 : index
    %c0_7 = arith.constant 0 : index
    %11 = vector.load %arg8[%c0_6, %c0_7] : memref<8x64xbf16, #tpu.memory_space<vmem>>, vector<8x64xbf16>
    %c0_8 = arith.constant 0 : index
    %c0_9 = arith.constant 0 : index
    %12 = vector.load %arg9[%c0_8, %c0_9] : memref<8x64xf32, #tpu.memory_space<vmem>>, vector<8x64xf32>
    %cst = arith.constant dense<0.000000e+00> : vector<8x256xf32>
    %13 = tpu.matmul %11, %4, %cst {dimension_numbers = #tpu.dot_dimension_numbers<[1], [0], [0], [1], [0, 0, 1, 1], [], []>} : vector<8x64xbf16>, vector<64x256xbf16>, vector<8x256xf32> -> vector<8x256xf32>
    %14 = vector.extract_strided_slice %13 {offsets = [0, 0], sizes = [8, 128], strides = [1, 1]} : vector<8x256xf32> to vector<8x128xf32>
    %15 = arith.index_cast %c0_i32_5 : i32 to index
    %c0_10 = arith.constant 0 : index
    %c0_11 = arith.constant 0 : index
    %16 = vector.load %arg3[%15, %c0_10, %c0_11] : memref<4x8x128xbf16, #tpu.memory_space<vmem>>, vector<1x8x128xbf16>
    %17 = vector.shape_cast %16 : vector<1x8x128xbf16> to vector<8x128xbf16>
    %18 = arith.extf %17 : vector<8x128xbf16> to vector<8x128xf32>
    %19 = arith.addf %14, %18 : vector<8x128xf32>
    %20 = vector.extract_strided_slice %13 {offsets = [0, 128], sizes = [8, 128], strides = [1, 1]} : vector<8x256xf32> to vector<8x128xf32>
    %21 = arith.index_cast %8 : i32 to index
    %c0_12 = arith.constant 0 : index
    %c0_13 = arith.constant 0 : index
    %22 = vector.load %arg4[%21, %c0_12, %c0_13] : memref<4x8x128xbf16, #tpu.memory_space<vmem>>, vector<1x8x128xbf16>
    %23 = vector.shape_cast %22 : vector<1x8x128xbf16> to vector<8x128xbf16>
    %24 = arith.extf %23 : vector<8x128xbf16> to vector<8x128xf32>
    %25 = arith.addf %20, %24 : vector<8x128xf32>
    %26 = vector.extract_strided_slice %19 {offsets = [0, 0], sizes = [8, 96], strides = [1, 1]} : vector<8x128xf32> to vector<8x96xf32>
    %27 = vector.extract_strided_slice %25 {offsets = [0, 0], sizes = [8, 96], strides = [1, 1]} : vector<8x128xf32> to vector<8x96xf32>
    %28 = tpu.concatenate %26, %27 in 1 : vector<8x96xf32>, vector<8x96xf32> -> vector<8x192xf32>
    %29 = arith.negf %28 : vector<8x192xf32>
    %30 = math.exp %29 : vector<8x192xf32>
    %cst_14 = arith.constant 1.000000e+00 : f32
    %31 = vector.broadcast %cst_14 : f32 to vector<8x192xf32>
    %32 = arith.addf %31, %30 : vector<8x192xf32>
    %33 = arith.divf %31, %32 : vector<8x192xf32>
    %34 = vector.extract_strided_slice %19 {offsets = [0, 96], sizes = [8, 32], strides = [1, 1]} : vector<8x128xf32> to vector<8x32xf32>
    %35 = vector.extract_strided_slice %25 {offsets = [0, 96], sizes = [8, 32], strides = [1, 1]} : vector<8x128xf32> to vector<8x32xf32>
    %36 = tpu.concatenate %34, %35 in 1 : vector<8x32xf32>, vector<8x32xf32> -> vector<8x64xf32>
    %37 = math.tanh %36 : vector<8x64xf32>
    %38 = vector.extract_strided_slice %33 {offsets = [0, 0], sizes = [8, 32], strides = [1, 1]} : vector<8x192xf32> to vector<8x32xf32>
    %39 = vector.extract_strided_slice %33 {offsets = [0, 96], sizes = [8, 32], strides = [1, 1]} : vector<8x192xf32> to vector<8x32xf32>
    %40 = tpu.concatenate %38, %39 in 1 : vector<8x32xf32>, vector<8x32xf32> -> vector<8x64xf32>
    %41 = vector.extract_strided_slice %33 {offsets = [0, 32], sizes = [8, 32], strides = [1, 1]} : vector<8x192xf32> to vector<8x32xf32>
    %42 = vector.extract_strided_slice %33 {offsets = [0, 128], sizes = [8, 32], strides = [1, 1]} : vector<8x192xf32> to vector<8x32xf32>
    %43 = tpu.concatenate %41, %42 in 1 : vector<8x32xf32>, vector<8x32xf32> -> vector<8x64xf32>
    %44 = vector.extract_strided_slice %33 {offsets = [0, 64], sizes = [8, 32], strides = [1, 1]} : vector<8x192xf32> to vector<8x32xf32>
    %45 = vector.extract_strided_slice %33 {offsets = [0, 160], sizes = [8, 32], strides = [1, 1]} : vector<8x192xf32> to vector<8x32xf32>
    %46 = tpu.concatenate %44, %45 in 1 : vector<8x32xf32>, vector<8x32xf32> -> vector<8x64xf32>
    %47 = arith.mulf %43, %12 : vector<8x64xf32>
    %48 = arith.mulf %40, %37 : vector<8x64xf32>
    %49 = arith.addf %47, %48 : vector<8x64xf32>
    %50 = math.tanh %49 : vector<8x64xf32>
    %51 = arith.mulf %46, %50 : vector<8x64xf32>
    %52 = vector.broadcast %9 : i32 to vector<8x1xi32>
    %53 = arith.cmpi slt, %52, %3 : vector<8x1xi32>
    %54 = vector.broadcast %10 : i32 to vector<8x1xi32>
    %55 = arith.cmpi slt, %54, %3 : vector<8x1xi32>
    %56 = arith.truncf %51 : vector<8x64xf32> to vector<8x64xbf16>
    %57 = vector.extract_strided_slice %56 {offsets = [0, 0], sizes = [8, 32], strides = [1, 1]} : vector<8x64xbf16> to vector<8x32xbf16>
    %58 = vector.extract_strided_slice %11 {offsets = [0, 0], sizes = [8, 32], strides = [1, 1]} : vector<8x64xbf16> to vector<8x32xbf16>
    %59 = vector.shape_cast %53 : vector<8x1xi1> to vector<8x1xi1>
    %60 = vector.broadcast %59 : vector<8x1xi1> to vector<8x32xi1>
    %61 = arith.select %60, %57, %58 : vector<8x32xi1>, vector<8x32xbf16>
    %62 = vector.extract_strided_slice %56 {offsets = [0, 32], sizes = [8, 32], strides = [1, 1]} : vector<8x64xbf16> to vector<8x32xbf16>
    %63 = vector.extract_strided_slice %11 {offsets = [0, 32], sizes = [8, 32], strides = [1, 1]} : vector<8x64xbf16> to vector<8x32xbf16>
    %64 = vector.shape_cast %55 : vector<8x1xi1> to vector<8x1xi1>
    %65 = vector.broadcast %64 : vector<8x1xi1> to vector<8x32xi1>
    %66 = arith.select %65, %62, %63 : vector<8x32xi1>, vector<8x32xbf16>
    %67 = tpu.concatenate %61, %66 in 1 : vector<8x32xbf16>, vector<8x32xbf16> -> vector<8x64xbf16>
    %c0_15 = arith.constant 0 : index
    %c0_16 = arith.constant 0 : index
    %68 = vector.load %arg8[%c0_15, %c0_16] : memref<8x64xbf16, #tpu.memory_space<vmem>>, vector<8x64xbf16>
    tpu.vector_store %arg8[%c0_15, %c0_16], %67 {strides = array<i32>} : memref<8x64xbf16, #tpu.memory_space<vmem>>, vector<8x64xbf16>,
    %69 = vector.extract_strided_slice %49 {offsets = [0, 0], sizes = [8, 32], strides = [1, 1]} : vector<8x64xf32> to vector<8x32xf32>
    %70 = vector.extract_strided_slice %12 {offsets = [0, 0], sizes = [8, 32], strides = [1, 1]} : vector<8x64xf32> to vector<8x32xf32>
    %71 = vector.shape_cast %53 : vector<8x1xi1> to vector<8x1xi1>
    %72 = vector.broadcast %71 : vector<8x1xi1> to vector<8x32xi1>
    %73 = arith.select %72, %69, %70 : vector<8x32xi1>, vector<8x32xf32>
    %74 = vector.extract_strided_slice %49 {offsets = [0, 32], sizes = [8, 32], strides = [1, 1]} : vector<8x64xf32> to vector<8x32xf32>
    %75 = vector.extract_strided_slice %12 {offsets = [0, 32], sizes = [8, 32], strides = [1, 1]} : vector<8x64xf32> to vector<8x32xf32>
    %76 = vector.shape_cast %55 : vector<8x1xi1> to vector<8x1xi1>
    %77 = vector.broadcast %76 : vector<8x1xi1> to vector<8x32xi1>
    %78 = arith.select %77, %74, %75 : vector<8x32xi1>, vector<8x32xf32>
    %79 = tpu.concatenate %73, %78 in 1 : vector<8x32xf32>, vector<8x32xf32> -> vector<8x64xf32>
    %c0_17 = arith.constant 0 : index
    %c0_18 = arith.constant 0 : index
    %80 = vector.load %arg9[%c0_17, %c0_18] : memref<8x64xf32, #tpu.memory_space<vmem>>, vector<8x64xf32>
    tpu.vector_store %arg9[%c0_17, %c0_18], %79 {strides = array<i32>} : memref<8x64xf32, #tpu.memory_space<vmem>>, vector<8x64xf32>,
    %81 = vector.extract_strided_slice %51 {offsets = [0, 0], sizes = [8, 32], strides = [1, 1]} : vector<8x64xf32> to vector<8x32xf32>
    %cst_19 = arith.constant 0.000000e+00 : f32
    %82 = vector.shape_cast %53 : vector<8x1xi1> to vector<8x1xi1>
    %83 = vector.broadcast %82 : vector<8x1xi1> to vector<8x32xi1>
    %84 = vector.broadcast %cst_19 : f32 to vector<8x32xf32>
    %85 = arith.select %83, %81, %84 : vector<8x32xi1>, vector<8x32xf32>
    %86 = arith.index_cast %c0_i32_5 : i32 to index
    %c0_20 = arith.constant 0 : index
    %c0_21 = arith.constant 0 : index
    %87 = vector.load %arg6[%86, %c0_20, %c0_21] : memref<4x8x32xf32, #tpu.memory_space<vmem>>, vector<1x8x32xf32>
    %88 = vector.shape_cast %87 : vector<1x8x32xf32> to vector<8x32xf32>
    %89 = vector.shape_cast %85 : vector<8x32xf32> to vector<1x8x32xf32>
    tpu.vector_store %arg6[%86, %c0_20, %c0_21], %89 {strides = array<i32>} : memref<4x8x32xf32, #tpu.memory_space<vmem>>, vector<1x8x32xf32>,
    %90 = vector.extract_strided_slice %51 {offsets = [0, 32], sizes = [8, 32], strides = [1, 1]} : vector<8x64xf32> to vector<8x32xf32>
    %cst_22 = arith.constant 0.000000e+00 : f32
    %91 = vector.shape_cast %55 : vector<8x1xi1> to vector<8x1xi1>
    %92 = vector.broadcast %91 : vector<8x1xi1> to vector<8x32xi1>
    %93 = vector.broadcast %cst_22 : f32 to vector<8x32xf32>
    %94 = arith.select %92, %90, %93 : vector<8x32xi1>, vector<8x32xf32>
    %95 = arith.index_cast %8 : i32 to index
    %c0_23 = arith.constant 0 : index
    %c0_24 = arith.constant 0 : index
    %96 = vector.load %arg7[%95, %c0_23, %c0_24] : memref<4x8x32xf32, #tpu.memory_space<vmem>>, vector<1x8x32xf32>
    %97 = vector.shape_cast %96 : vector<1x8x32xf32> to vector<8x32xf32>
    %98 = vector.shape_cast %94 : vector<8x32xf32> to vector<1x8x32xf32>
    tpu.vector_store %arg7[%95, %c0_23, %c0_24], %98 {strides = array<i32>} : memref<4x8x32xf32, #tpu.memory_space<vmem>>, vector<1x8x32xf32>,
    %c1_i32 = arith.constant 1 : i32
    %c3_i32_25 = arith.constant 3 : i32
    %99 = arith.subi %c3_i32_25, %c1_i32 : i32
    %100 = arith.addi %5, %c1_i32 : i32
    %101 = arith.addi %7, %99 : i32
    %c0_26 = arith.constant 0 : index
    %c0_27 = arith.constant 0 : index
    %102 = vector.load %arg8[%c0_26, %c0_27] : memref<8x64xbf16, #tpu.memory_space<vmem>>, vector<8x64xbf16>
    %c0_28 = arith.constant 0 : index
    %c0_29 = arith.constant 0 : index
    %103 = vector.load %arg9[%c0_28, %c0_29] : memref<8x64xf32, #tpu.memory_space<vmem>>, vector<8x64xf32>
    %cst_30 = arith.constant dense<0.000000e+00> : vector<8x256xf32>
    %104 = tpu.matmul %102, %4, %cst_30 {dimension_numbers = #tpu.dot_dimension_numbers<[1], [0], [0], [1], [0, 0, 1, 1], [], []>} : vector<8x64xbf16>, vector<64x256xbf16>, vector<8x256xf32> -> vector<8x256xf32>
    %105 = vector.extract_strided_slice %104 {offsets = [0, 0], sizes = [8, 128], strides = [1, 1]} : vector<8x256xf32> to vector<8x128xf32>
    %106 = arith.index_cast %c1_i32 : i32 to index
    %c0_31 = arith.constant 0 : index
    %c0_32 = arith.constant 0 : index
    %107 = vector.load %arg3[%106, %c0_31, %c0_32] : memref<4x8x128xbf16, #tpu.memory_space<vmem>>, vector<1x8x128xbf16>
    %108 = vector.shape_cast %107 : vector<1x8x128xbf16> to vector<8x128xbf16>
    %109 = arith.extf %108 : vector<8x128xbf16> to vector<8x128xf32>
    %110 = arith.addf %105, %109 : vector<8x128xf32>
    %111 = vector.extract_strided_slice %104 {offsets = [0, 128], sizes = [8, 128], strides = [1, 1]} : vector<8x256xf32> to vector<8x128xf32>
    %112 = arith.index_cast %99 : i32 to index
    %c0_33 = arith.constant 0 : index
    %c0_34 = arith.constant 0 : index
    %113 = vector.load %arg4[%112, %c0_33, %c0_34] : memref<4x8x128xbf16, #tpu.memory_space<vmem>>, vector<1x8x128xbf16>
    %114 = vector.shape_cast %113 : vector<1x8x128xbf16> to vector<8x128xbf16>
    %115 = arith.extf %114 : vector<8x128xbf16> to vector<8x128xf32>
    %116 = arith.addf %111, %115 : vector<8x128xf32>
    %117 = vector.extract_strided_slice %110 {offsets = [0, 0], sizes = [8, 96], strides = [1, 1]} : vector<8x128xf32> to vector<8x96xf32>
    %118 = vector.extract_strided_slice %116 {offsets = [0, 0], sizes = [8, 96], strides = [1, 1]} : vector<8x128xf32> to vector<8x96xf32>
    %119 = tpu.concatenate %117, %118 in 1 : vector<8x96xf32>, vector<8x96xf32> -> vector<8x192xf32>
    %120 = arith.negf %119 : vector<8x192xf32>
    %121 = math.exp %120 : vector<8x192xf32>
    %cst_35 = arith.constant 1.000000e+00 : f32
    %122 = vector.broadcast %cst_35 : f32 to vector<8x192xf32>
    %123 = arith.addf %122, %121 : vector<8x192xf32>
    %124 = arith.divf %122, %123 : vector<8x192xf32>
    %125 = vector.extract_strided_slice %110 {offsets = [0, 96], sizes = [8, 32], strides = [1, 1]} : vector<8x128xf32> to vector<8x32xf32>
    %126 = vector.extract_strided_slice %116 {offsets = [0, 96], sizes = [8, 32], strides = [1, 1]} : vector<8x128xf32> to vector<8x32xf32>
    %127 = tpu.concatenate %125, %126 in 1 : vector<8x32xf32>, vector<8x32xf32> -> vector<8x64xf32>
    %128 = math.tanh %127 : vector<8x64xf32>
    %129 = vector.extract_strided_slice %124 {offsets = [0, 0], sizes = [8, 32], strides = [1, 1]} : vector<8x192xf32> to vector<8x32xf32>
    %130 = vector.extract_strided_slice %124 {offsets = [0, 96], sizes = [8, 32], strides = [1, 1]} : vector<8x192xf32> to vector<8x32xf32>
    %131 = tpu.concatenate %129, %130 in 1 : vector<8x32xf32>, vector<8x32xf32> -> vector<8x64xf32>
    %132 = vector.extract_strided_slice %124 {offsets = [0, 32], sizes = [8, 32], strides = [1, 1]} : vector<8x192xf32> to vector<8x32xf32>
    %133 = vector.extract_strided_slice %124 {offsets = [0, 128], sizes = [8, 32], strides = [1, 1]} : vector<8x192xf32> to vector<8x32xf32>
    %134 = tpu.concatenate %132, %133 in 1 : vector<8x32xf32>, vector<8x32xf32> -> vector<8x64xf32>
    %135 = vector.extract_strided_slice %124 {offsets = [0, 64], sizes = [8, 32], strides = [1, 1]} : vector<8x192xf32> to vector<8x32xf32>
    %136 = vector.extract_strided_slice %124 {offsets = [0, 160], sizes = [8, 32], strides = [1, 1]} : vector<8x192xf32> to vector<8x32xf32>
    %137 = tpu.concatenate %135, %136 in 1 : vector<8x32xf32>, vector<8x32xf32> -> vector<8x64xf32>
    %138 = arith.mulf %134, %103 : vector<8x64xf32>
    %139 = arith.mulf %131, %128 : vector<8x64xf32>
    %140 = arith.addf %138, %139 : vector<8x64xf32>
    %141 = math.tanh %140 : vector<8x64xf32>
    %142 = arith.mulf %137, %141 : vector<8x64xf32>
    %143 = vector.broadcast %100 : i32 to vector<8x1xi32>
    %144 = arith.cmpi slt, %143, %3 : vector<8x1xi32>
    %145 = vector.broadcast %101 : i32 to vector<8x1xi32>
    %146 = arith.cmpi slt, %145, %3 : vector<8x1xi32>
    %147 = arith.truncf %142 : vector<8x64xf32> to vector<8x64xbf16>
    %148 = vector.extract_strided_slice %147 {offsets = [0, 0], sizes = [8, 32], strides = [1, 1]} : vector<8x64xbf16> to vector<8x32xbf16>
    %149 = vector.extract_strided_slice %102 {offsets = [0, 0], sizes = [8, 32], strides = [1, 1]} : vector<8x64xbf16> to vector<8x32xbf16>
    %150 = vector.shape_cast %144 : vector<8x1xi1> to vector<8x1xi1>
    %151 = vector.broadcast %150 : vector<8x1xi1> to vector<8x32xi1>
    %152 = arith.select %151, %148, %149 : vector<8x32xi1>, vector<8x32xbf16>
    %153 = vector.extract_strided_slice %147 {offsets = [0, 32], sizes = [8, 32], strides = [1, 1]} : vector<8x64xbf16> to vector<8x32xbf16>
    %154 = vector.extract_strided_slice %102 {offsets = [0, 32], sizes = [8, 32], strides = [1, 1]} : vector<8x64xbf16> to vector<8x32xbf16>
    %155 = vector.shape_cast %146 : vector<8x1xi1> to vector<8x1xi1>
    %156 = vector.broadcast %155 : vector<8x1xi1> to vector<8x32xi1>
    %157 = arith.select %156, %153, %154 : vector<8x32xi1>, vector<8x32xbf16>
    %158 = tpu.concatenate %152, %157 in 1 : vector<8x32xbf16>, vector<8x32xbf16> -> vector<8x64xbf16>
    %c0_36 = arith.constant 0 : index
    %c0_37 = arith.constant 0 : index
    %159 = vector.load %arg8[%c0_36, %c0_37] : memref<8x64xbf16, #tpu.memory_space<vmem>>, vector<8x64xbf16>
    tpu.vector_store %arg8[%c0_36, %c0_37], %158 {strides = array<i32>} : memref<8x64xbf16, #tpu.memory_space<vmem>>, vector<8x64xbf16>,
    %160 = vector.extract_strided_slice %140 {offsets = [0, 0], sizes = [8, 32], strides = [1, 1]} : vector<8x64xf32> to vector<8x32xf32>
    %161 = vector.extract_strided_slice %103 {offsets = [0, 0], sizes = [8, 32], strides = [1, 1]} : vector<8x64xf32> to vector<8x32xf32>
    %162 = vector.shape_cast %144 : vector<8x1xi1> to vector<8x1xi1>
    %163 = vector.broadcast %162 : vector<8x1xi1> to vector<8x32xi1>
    %164 = arith.select %163, %160, %161 : vector<8x32xi1>, vector<8x32xf32>
    %165 = vector.extract_strided_slice %140 {offsets = [0, 32], sizes = [8, 32], strides = [1, 1]} : vector<8x64xf32> to vector<8x32xf32>
    %166 = vector.extract_strided_slice %103 {offsets = [0, 32], sizes = [8, 32], strides = [1, 1]} : vector<8x64xf32> to vector<8x32xf32>
    %167 = vector.shape_cast %146 : vector<8x1xi1> to vector<8x1xi1>
    %168 = vector.broadcast %167 : vector<8x1xi1> to vector<8x32xi1>
    %169 = arith.select %168, %165, %166 : vector<8x32xi1>, vector<8x32xf32>
    %170 = tpu.concatenate %164, %169 in 1 : vector<8x32xf32>, vector<8x32xf32> -> vector<8x64xf32>
    %c0_38 = arith.constant 0 : index
    %c0_39 = arith.constant 0 : index
    %171 = vector.load %arg9[%c0_38, %c0_39] : memref<8x64xf32, #tpu.memory_space<vmem>>, vector<8x64xf32>
    tpu.vector_store %arg9[%c0_38, %c0_39], %170 {strides = array<i32>} : memref<8x64xf32, #tpu.memory_space<vmem>>, vector<8x64xf32>,
    %172 = vector.extract_strided_slice %142 {offsets = [0, 0], sizes = [8, 32], strides = [1, 1]} : vector<8x64xf32> to vector<8x32xf32>
    %cst_40 = arith.constant 0.000000e+00 : f32
    %173 = vector.shape_cast %144 : vector<8x1xi1> to vector<8x1xi1>
    %174 = vector.broadcast %173 : vector<8x1xi1> to vector<8x32xi1>
    %175 = vector.broadcast %cst_40 : f32 to vector<8x32xf32>
    %176 = arith.select %174, %172, %175 : vector<8x32xi1>, vector<8x32xf32>
    %177 = arith.index_cast %c1_i32 : i32 to index
    %c0_41 = arith.constant 0 : index
    %c0_42 = arith.constant 0 : index
    %178 = vector.load %arg6[%177, %c0_41, %c0_42] : memref<4x8x32xf32, #tpu.memory_space<vmem>>, vector<1x8x32xf32>
    %179 = vector.shape_cast %178 : vector<1x8x32xf32> to vector<8x32xf32>
    %180 = vector.shape_cast %176 : vector<8x32xf32> to vector<1x8x32xf32>
    tpu.vector_store %arg6[%177, %c0_41, %c0_42], %180 {strides = array<i32>} : memref<4x8x32xf32, #tpu.memory_space<vmem>>, vector<1x8x32xf32>,
    %181 = vector.extract_strided_slice %142 {offsets = [0, 32], sizes = [8, 32], strides = [1, 1]} : vector<8x64xf32> to vector<8x32xf32>
    %cst_43 = arith.constant 0.000000e+00 : f32
    %182 = vector.shape_cast %146 : vector<8x1xi1> to vector<8x1xi1>
    %183 = vector.broadcast %182 : vector<8x1xi1> to vector<8x32xi1>
    %184 = vector.broadcast %cst_43 : f32 to vector<8x32xf32>
    %185 = arith.select %183, %181, %184 : vector<8x32xi1>, vector<8x32xf32>
    %186 = arith.index_cast %99 : i32 to index
    %c0_44 = arith.constant 0 : index
    %c0_45 = arith.constant 0 : index
    %187 = vector.load %arg7[%186, %c0_44, %c0_45] : memref<4x8x32xf32, #tpu.memory_space<vmem>>, vector<1x8x32xf32>
    %188 = vector.shape_cast %187 : vector<1x8x32xf32> to vector<8x32xf32>
    %189 = vector.shape_cast %185 : vector<8x32xf32> to vector<1x8x32xf32>
    tpu.vector_store %arg7[%186, %c0_44, %c0_45], %189 {strides = array<i32>} : memref<4x8x32xf32, #tpu.memory_space<vmem>>, vector<1x8x32xf32>,
    %c2_i32_46 = arith.constant 2 : i32
    %c3_i32_47 = arith.constant 3 : i32
    %190 = arith.subi %c3_i32_47, %c2_i32_46 : i32
    %191 = arith.addi %5, %c2_i32_46 : i32
    %192 = arith.addi %7, %190 : i32
    %c0_48 = arith.constant 0 : index
    %c0_49 = arith.constant 0 : index
    %193 = vector.load %arg8[%c0_48, %c0_49] : memref<8x64xbf16, #tpu.memory_space<vmem>>, vector<8x64xbf16>
    %c0_50 = arith.constant 0 : index
    %c0_51 = arith.constant 0 : index
    %194 = vector.load %arg9[%c0_50, %c0_51] : memref<8x64xf32, #tpu.memory_space<vmem>>, vector<8x64xf32>
    %cst_52 = arith.constant dense<0.000000e+00> : vector<8x256xf32>
    %195 = tpu.matmul %193, %4, %cst_52 {dimension_numbers = #tpu.dot_dimension_numbers<[1], [0], [0], [1], [0, 0, 1, 1], [], []>} : vector<8x64xbf16>, vector<64x256xbf16>, vector<8x256xf32> -> vector<8x256xf32>
    %196 = vector.extract_strided_slice %195 {offsets = [0, 0], sizes = [8, 128], strides = [1, 1]} : vector<8x256xf32> to vector<8x128xf32>
    %197 = arith.index_cast %c2_i32_46 : i32 to index
    %c0_53 = arith.constant 0 : index
    %c0_54 = arith.constant 0 : index
    %198 = vector.load %arg3[%197, %c0_53, %c0_54] : memref<4x8x128xbf16, #tpu.memory_space<vmem>>, vector<1x8x128xbf16>
    %199 = vector.shape_cast %198 : vector<1x8x128xbf16> to vector<8x128xbf16>
    %200 = arith.extf %199 : vector<8x128xbf16> to vector<8x128xf32>
    %201 = arith.addf %196, %200 : vector<8x128xf32>
    %202 = vector.extract_strided_slice %195 {offsets = [0, 128], sizes = [8, 128], strides = [1, 1]} : vector<8x256xf32> to vector<8x128xf32>
    %203 = arith.index_cast %190 : i32 to index
    %c0_55 = arith.constant 0 : index
    %c0_56 = arith.constant 0 : index
    %204 = vector.load %arg4[%203, %c0_55, %c0_56] : memref<4x8x128xbf16, #tpu.memory_space<vmem>>, vector<1x8x128xbf16>
    %205 = vector.shape_cast %204 : vector<1x8x128xbf16> to vector<8x128xbf16>
    %206 = arith.extf %205 : vector<8x128xbf16> to vector<8x128xf32>
    %207 = arith.addf %202, %206 : vector<8x128xf32>
    %208 = vector.extract_strided_slice %201 {offsets = [0, 0], sizes = [8, 96], strides = [1, 1]} : vector<8x128xf32> to vector<8x96xf32>
    %209 = vector.extract_strided_slice %207 {offsets = [0, 0], sizes = [8, 96], strides = [1, 1]} : vector<8x128xf32> to vector<8x96xf32>
    %210 = tpu.concatenate %208, %209 in 1 : vector<8x96xf32>, vector<8x96xf32> -> vector<8x192xf32>
    %211 = arith.negf %210 : vector<8x192xf32>
    %212 = math.exp %211 : vector<8x192xf32>
    %cst_57 = arith.constant 1.000000e+00 : f32
    %213 = vector.broadcast %cst_57 : f32 to vector<8x192xf32>
    %214 = arith.addf %213, %212 : vector<8x192xf32>
    %215 = arith.divf %213, %214 : vector<8x192xf32>
    %216 = vector.extract_strided_slice %201 {offsets = [0, 96], sizes = [8, 32], strides = [1, 1]} : vector<8x128xf32> to vector<8x32xf32>
    %217 = vector.extract_strided_slice %207 {offsets = [0, 96], sizes = [8, 32], strides = [1, 1]} : vector<8x128xf32> to vector<8x32xf32>
    %218 = tpu.concatenate %216, %217 in 1 : vector<8x32xf32>, vector<8x32xf32> -> vector<8x64xf32>
    %219 = math.tanh %218 : vector<8x64xf32>
    %220 = vector.extract_strided_slice %215 {offsets = [0, 0], sizes = [8, 32], strides = [1, 1]} : vector<8x192xf32> to vector<8x32xf32>
    %221 = vector.extract_strided_slice %215 {offsets = [0, 96], sizes = [8, 32], strides = [1, 1]} : vector<8x192xf32> to vector<8x32xf32>
    %222 = tpu.concatenate %220, %221 in 1 : vector<8x32xf32>, vector<8x32xf32> -> vector<8x64xf32>
    %223 = vector.extract_strided_slice %215 {offsets = [0, 32], sizes = [8, 32], strides = [1, 1]} : vector<8x192xf32> to vector<8x32xf32>
    %224 = vector.extract_strided_slice %215 {offsets = [0, 128], sizes = [8, 32], strides = [1, 1]} : vector<8x192xf32> to vector<8x32xf32>
    %225 = tpu.concatenate %223, %224 in 1 : vector<8x32xf32>, vector<8x32xf32> -> vector<8x64xf32>
    %226 = vector.extract_strided_slice %215 {offsets = [0, 64], sizes = [8, 32], strides = [1, 1]} : vector<8x192xf32> to vector<8x32xf32>
    %227 = vector.extract_strided_slice %215 {offsets = [0, 160], sizes = [8, 32], strides = [1, 1]} : vector<8x192xf32> to vector<8x32xf32>
    %228 = tpu.concatenate %226, %227 in 1 : vector<8x32xf32>, vector<8x32xf32> -> vector<8x64xf32>
    %229 = arith.mulf %225, %194 : vector<8x64xf32>
    %230 = arith.mulf %222, %219 : vector<8x64xf32>
    %231 = arith.addf %229, %230 : vector<8x64xf32>
    %232 = math.tanh %231 : vector<8x64xf32>
    %233 = arith.mulf %228, %232 : vector<8x64xf32>
    %234 = vector.broadcast %191 : i32 to vector<8x1xi32>
    %235 = arith.cmpi slt, %234, %3 : vector<8x1xi32>
    %236 = vector.broadcast %192 : i32 to vector<8x1xi32>
    %237 = arith.cmpi slt, %236, %3 : vector<8x1xi32>
    %238 = arith.truncf %233 : vector<8x64xf32> to vector<8x64xbf16>
    %239 = vector.extract_strided_slice %238 {offsets = [0, 0], sizes = [8, 32], strides = [1, 1]} : vector<8x64xbf16> to vector<8x32xbf16>
    %240 = vector.extract_strided_slice %193 {offsets = [0, 0], sizes = [8, 32], strides = [1, 1]} : vector<8x64xbf16> to vector<8x32xbf16>
    %241 = vector.shape_cast %235 : vector<8x1xi1> to vector<8x1xi1>
    %242 = vector.broadcast %241 : vector<8x1xi1> to vector<8x32xi1>
    %243 = arith.select %242, %239, %240 : vector<8x32xi1>, vector<8x32xbf16>
    %244 = vector.extract_strided_slice %238 {offsets = [0, 32], sizes = [8, 32], strides = [1, 1]} : vector<8x64xbf16> to vector<8x32xbf16>
    %245 = vector.extract_strided_slice %193 {offsets = [0, 32], sizes = [8, 32], strides = [1, 1]} : vector<8x64xbf16> to vector<8x32xbf16>
    %246 = vector.shape_cast %237 : vector<8x1xi1> to vector<8x1xi1>
    %247 = vector.broadcast %246 : vector<8x1xi1> to vector<8x32xi1>
    %248 = arith.select %247, %244, %245 : vector<8x32xi1>, vector<8x32xbf16>
    %249 = tpu.concatenate %243, %248 in 1 : vector<8x32xbf16>, vector<8x32xbf16> -> vector<8x64xbf16>
    %c0_58 = arith.constant 0 : index
    %c0_59 = arith.constant 0 : index
    %250 = vector.load %arg8[%c0_58, %c0_59] : memref<8x64xbf16, #tpu.memory_space<vmem>>, vector<8x64xbf16>
    tpu.vector_store %arg8[%c0_58, %c0_59], %249 {strides = array<i32>} : memref<8x64xbf16, #tpu.memory_space<vmem>>, vector<8x64xbf16>,
    %251 = vector.extract_strided_slice %231 {offsets = [0, 0], sizes = [8, 32], strides = [1, 1]} : vector<8x64xf32> to vector<8x32xf32>
    %252 = vector.extract_strided_slice %194 {offsets = [0, 0], sizes = [8, 32], strides = [1, 1]} : vector<8x64xf32> to vector<8x32xf32>
    %253 = vector.shape_cast %235 : vector<8x1xi1> to vector<8x1xi1>
    %254 = vector.broadcast %253 : vector<8x1xi1> to vector<8x32xi1>
    %255 = arith.select %254, %251, %252 : vector<8x32xi1>, vector<8x32xf32>
    %256 = vector.extract_strided_slice %231 {offsets = [0, 32], sizes = [8, 32], strides = [1, 1]} : vector<8x64xf32> to vector<8x32xf32>
    %257 = vector.extract_strided_slice %194 {offsets = [0, 32], sizes = [8, 32], strides = [1, 1]} : vector<8x64xf32> to vector<8x32xf32>
    %258 = vector.shape_cast %237 : vector<8x1xi1> to vector<8x1xi1>
    %259 = vector.broadcast %258 : vector<8x1xi1> to vector<8x32xi1>
    %260 = arith.select %259, %256, %257 : vector<8x32xi1>, vector<8x32xf32>
    %261 = tpu.concatenate %255, %260 in 1 : vector<8x32xf32>, vector<8x32xf32> -> vector<8x64xf32>
    %c0_60 = arith.constant 0 : index
    %c0_61 = arith.constant 0 : index
    %262 = vector.load %arg9[%c0_60, %c0_61] : memref<8x64xf32, #tpu.memory_space<vmem>>, vector<8x64xf32>
    tpu.vector_store %arg9[%c0_60, %c0_61], %261 {strides = array<i32>} : memref<8x64xf32, #tpu.memory_space<vmem>>, vector<8x64xf32>,
    %263 = vector.extract_strided_slice %233 {offsets = [0, 0], sizes = [8, 32], strides = [1, 1]} : vector<8x64xf32> to vector<8x32xf32>
    %cst_62 = arith.constant 0.000000e+00 : f32
    %264 = vector.shape_cast %235 : vector<8x1xi1> to vector<8x1xi1>
    %265 = vector.broadcast %264 : vector<8x1xi1> to vector<8x32xi1>
    %266 = vector.broadcast %cst_62 : f32 to vector<8x32xf32>
    %267 = arith.select %265, %263, %266 : vector<8x32xi1>, vector<8x32xf32>
    %268 = arith.index_cast %c2_i32_46 : i32 to index
    %c0_63 = arith.constant 0 : index
    %c0_64 = arith.constant 0 : index
    %269 = vector.load %arg6[%268, %c0_63, %c0_64] : memref<4x8x32xf32, #tpu.memory_space<vmem>>, vector<1x8x32xf32>
    %270 = vector.shape_cast %269 : vector<1x8x32xf32> to vector<8x32xf32>
    %271 = vector.shape_cast %267 : vector<8x32xf32> to vector<1x8x32xf32>
    tpu.vector_store %arg6[%268, %c0_63, %c0_64], %271 {strides = array<i32>} : memref<4x8x32xf32, #tpu.memory_space<vmem>>, vector<1x8x32xf32>,
    %272 = vector.extract_strided_slice %233 {offsets = [0, 32], sizes = [8, 32], strides = [1, 1]} : vector<8x64xf32> to vector<8x32xf32>
    %cst_65 = arith.constant 0.000000e+00 : f32
    %273 = vector.shape_cast %237 : vector<8x1xi1> to vector<8x1xi1>
    %274 = vector.broadcast %273 : vector<8x1xi1> to vector<8x32xi1>
    %275 = vector.broadcast %cst_65 : f32 to vector<8x32xf32>
    %276 = arith.select %274, %272, %275 : vector<8x32xi1>, vector<8x32xf32>
    %277 = arith.index_cast %190 : i32 to index
    %c0_66 = arith.constant 0 : index
    %c0_67 = arith.constant 0 : index
    %278 = vector.load %arg7[%277, %c0_66, %c0_67] : memref<4x8x32xf32, #tpu.memory_space<vmem>>, vector<1x8x32xf32>
    %279 = vector.shape_cast %278 : vector<1x8x32xf32> to vector<8x32xf32>
    %280 = vector.shape_cast %276 : vector<8x32xf32> to vector<1x8x32xf32>
    tpu.vector_store %arg7[%277, %c0_66, %c0_67], %280 {strides = array<i32>} : memref<4x8x32xf32, #tpu.memory_space<vmem>>, vector<1x8x32xf32>,
    %c3_i32_68 = arith.constant 3 : i32
    %c3_i32_69 = arith.constant 3 : i32
    %281 = arith.subi %c3_i32_69, %c3_i32_68 : i32
    %282 = arith.addi %5, %c3_i32_68 : i32
    %283 = arith.addi %7, %281 : i32
    %c0_70 = arith.constant 0 : index
    %c0_71 = arith.constant 0 : index
    %284 = vector.load %arg8[%c0_70, %c0_71] : memref<8x64xbf16, #tpu.memory_space<vmem>>, vector<8x64xbf16>
    %c0_72 = arith.constant 0 : index
    %c0_73 = arith.constant 0 : index
    %285 = vector.load %arg9[%c0_72, %c0_73] : memref<8x64xf32, #tpu.memory_space<vmem>>, vector<8x64xf32>
    %cst_74 = arith.constant dense<0.000000e+00> : vector<8x256xf32>
    %286 = tpu.matmul %284, %4, %cst_74 {dimension_numbers = #tpu.dot_dimension_numbers<[1], [0], [0], [1], [0, 0, 1, 1], [], []>} : vector<8x64xbf16>, vector<64x256xbf16>, vector<8x256xf32> -> vector<8x256xf32>
    %287 = vector.extract_strided_slice %286 {offsets = [0, 0], sizes = [8, 128], strides = [1, 1]} : vector<8x256xf32> to vector<8x128xf32>
    %288 = arith.index_cast %c3_i32_68 : i32 to index
    %c0_75 = arith.constant 0 : index
    %c0_76 = arith.constant 0 : index
    %289 = vector.load %arg3[%288, %c0_75, %c0_76] : memref<4x8x128xbf16, #tpu.memory_space<vmem>>, vector<1x8x128xbf16>
    %290 = vector.shape_cast %289 : vector<1x8x128xbf16> to vector<8x128xbf16>
    %291 = arith.extf %290 : vector<8x128xbf16> to vector<8x128xf32>
    %292 = arith.addf %287, %291 : vector<8x128xf32>
    %293 = vector.extract_strided_slice %286 {offsets = [0, 128], sizes = [8, 128], strides = [1, 1]} : vector<8x256xf32> to vector<8x128xf32>
    %294 = arith.index_cast %281 : i32 to index
    %c0_77 = arith.constant 0 : index
    %c0_78 = arith.constant 0 : index
    %295 = vector.load %arg4[%294, %c0_77, %c0_78] : memref<4x8x128xbf16, #tpu.memory_space<vmem>>, vector<1x8x128xbf16>
    %296 = vector.shape_cast %295 : vector<1x8x128xbf16> to vector<8x128xbf16>
    %297 = arith.extf %296 : vector<8x128xbf16> to vector<8x128xf32>
    %298 = arith.addf %293, %297 : vector<8x128xf32>
    %299 = vector.extract_strided_slice %292 {offsets = [0, 0], sizes = [8, 96], strides = [1, 1]} : vector<8x128xf32> to vector<8x96xf32>
    %300 = vector.extract_strided_slice %298 {offsets = [0, 0], sizes = [8, 96], strides = [1, 1]} : vector<8x128xf32> to vector<8x96xf32>
    %301 = tpu.concatenate %299, %300 in 1 : vector<8x96xf32>, vector<8x96xf32> -> vector<8x192xf32>
    %302 = arith.negf %301 : vector<8x192xf32>
    %303 = math.exp %302 : vector<8x192xf32>
    %cst_79 = arith.constant 1.000000e+00 : f32
    %304 = vector.broadcast %cst_79 : f32 to vector<8x192xf32>
    %305 = arith.addf %304, %303 : vector<8x192xf32>
    %306 = arith.divf %304, %305 : vector<8x192xf32>
    %307 = vector.extract_strided_slice %292 {offsets = [0, 96], sizes = [8, 32], strides = [1, 1]} : vector<8x128xf32> to vector<8x32xf32>
    %308 = vector.extract_strided_slice %298 {offsets = [0, 96], sizes = [8, 32], strides = [1, 1]} : vector<8x128xf32> to vector<8x32xf32>
    %309 = tpu.concatenate %307, %308 in 1 : vector<8x32xf32>, vector<8x32xf32> -> vector<8x64xf32>
    %310 = math.tanh %309 : vector<8x64xf32>
    %311 = vector.extract_strided_slice %306 {offsets = [0, 0], sizes = [8, 32], strides = [1, 1]} : vector<8x192xf32> to vector<8x32xf32>
    %312 = vector.extract_strided_slice %306 {offsets = [0, 96], sizes = [8, 32], strides = [1, 1]} : vector<8x192xf32> to vector<8x32xf32>
    %313 = tpu.concatenate %311, %312 in 1 : vector<8x32xf32>, vector<8x32xf32> -> vector<8x64xf32>
    %314 = vector.extract_strided_slice %306 {offsets = [0, 32], sizes = [8, 32], strides = [1, 1]} : vector<8x192xf32> to vector<8x32xf32>
    %315 = vector.extract_strided_slice %306 {offsets = [0, 128], sizes = [8, 32], strides = [1, 1]} : vector<8x192xf32> to vector<8x32xf32>
    %316 = tpu.concatenate %314, %315 in 1 : vector<8x32xf32>, vector<8x32xf32> -> vector<8x64xf32>
    %317 = vector.extract_strided_slice %306 {offsets = [0, 64], sizes = [8, 32], strides = [1, 1]} : vector<8x192xf32> to vector<8x32xf32>
    %318 = vector.extract_strided_slice %306 {offsets = [0, 160], sizes = [8, 32], strides = [1, 1]} : vector<8x192xf32> to vector<8x32xf32>
    %319 = tpu.concatenate %317, %318 in 1 : vector<8x32xf32>, vector<8x32xf32> -> vector<8x64xf32>
    %320 = arith.mulf %316, %285 : vector<8x64xf32>
    %321 = arith.mulf %313, %310 : vector<8x64xf32>
    %322 = arith.addf %320, %321 : vector<8x64xf32>
    %323 = math.tanh %322 : vector<8x64xf32>
    %324 = arith.mulf %319, %323 : vector<8x64xf32>
    %325 = vector.broadcast %282 : i32 to vector<8x1xi32>
    %326 = arith.cmpi slt, %325, %3 : vector<8x1xi32>
    %327 = vector.broadcast %283 : i32 to vector<8x1xi32>
    %328 = arith.cmpi slt, %327, %3 : vector<8x1xi32>
    %329 = arith.truncf %324 : vector<8x64xf32> to vector<8x64xbf16>
    %330 = vector.extract_strided_slice %329 {offsets = [0, 0], sizes = [8, 32], strides = [1, 1]} : vector<8x64xbf16> to vector<8x32xbf16>
    %331 = vector.extract_strided_slice %284 {offsets = [0, 0], sizes = [8, 32], strides = [1, 1]} : vector<8x64xbf16> to vector<8x32xbf16>
    %332 = vector.shape_cast %326 : vector<8x1xi1> to vector<8x1xi1>
    %333 = vector.broadcast %332 : vector<8x1xi1> to vector<8x32xi1>
    %334 = arith.select %333, %330, %331 : vector<8x32xi1>, vector<8x32xbf16>
    %335 = vector.extract_strided_slice %329 {offsets = [0, 32], sizes = [8, 32], strides = [1, 1]} : vector<8x64xbf16> to vector<8x32xbf16>
    %336 = vector.extract_strided_slice %284 {offsets = [0, 32], sizes = [8, 32], strides = [1, 1]} : vector<8x64xbf16> to vector<8x32xbf16>
    %337 = vector.shape_cast %328 : vector<8x1xi1> to vector<8x1xi1>
    %338 = vector.broadcast %337 : vector<8x1xi1> to vector<8x32xi1>
    %339 = arith.select %338, %335, %336 : vector<8x32xi1>, vector<8x32xbf16>
    %340 = tpu.concatenate %334, %339 in 1 : vector<8x32xbf16>, vector<8x32xbf16> -> vector<8x64xbf16>
    %c0_80 = arith.constant 0 : index
    %c0_81 = arith.constant 0 : index
    %341 = vector.load %arg8[%c0_80, %c0_81] : memref<8x64xbf16, #tpu.memory_space<vmem>>, vector<8x64xbf16>
    tpu.vector_store %arg8[%c0_80, %c0_81], %340 {strides = array<i32>} : memref<8x64xbf16, #tpu.memory_space<vmem>>, vector<8x64xbf16>,
    %342 = vector.extract_strided_slice %322 {offsets = [0, 0], sizes = [8, 32], strides = [1, 1]} : vector<8x64xf32> to vector<8x32xf32>
    %343 = vector.extract_strided_slice %285 {offsets = [0, 0], sizes = [8, 32], strides = [1, 1]} : vector<8x64xf32> to vector<8x32xf32>
    %344 = vector.shape_cast %326 : vector<8x1xi1> to vector<8x1xi1>
    %345 = vector.broadcast %344 : vector<8x1xi1> to vector<8x32xi1>
    %346 = arith.select %345, %342, %343 : vector<8x32xi1>, vector<8x32xf32>
    %347 = vector.extract_strided_slice %322 {offsets = [0, 32], sizes = [8, 32], strides = [1, 1]} : vector<8x64xf32> to vector<8x32xf32>
    %348 = vector.extract_strided_slice %285 {offsets = [0, 32], sizes = [8, 32], strides = [1, 1]} : vector<8x64xf32> to vector<8x32xf32>
    %349 = vector.shape_cast %328 : vector<8x1xi1> to vector<8x1xi1>
    %350 = vector.broadcast %349 : vector<8x1xi1> to vector<8x32xi1>
    %351 = arith.select %350, %347, %348 : vector<8x32xi1>, vector<8x32xf32>
    %352 = tpu.concatenate %346, %351 in 1 : vector<8x32xf32>, vector<8x32xf32> -> vector<8x64xf32>
    %c0_82 = arith.constant 0 : index
    %c0_83 = arith.constant 0 : index
    %353 = vector.load %arg9[%c0_82, %c0_83] : memref<8x64xf32, #tpu.memory_space<vmem>>, vector<8x64xf32>
    tpu.vector_store %arg9[%c0_82, %c0_83], %352 {strides = array<i32>} : memref<8x64xf32, #tpu.memory_space<vmem>>, vector<8x64xf32>,
    %354 = vector.extract_strided_slice %324 {offsets = [0, 0], sizes = [8, 32], strides = [1, 1]} : vector<8x64xf32> to vector<8x32xf32>
    %cst_84 = arith.constant 0.000000e+00 : f32
    %355 = vector.shape_cast %326 : vector<8x1xi1> to vector<8x1xi1>
    %356 = vector.broadcast %355 : vector<8x1xi1> to vector<8x32xi1>
    %357 = vector.broadcast %cst_84 : f32 to vector<8x32xf32>
    %358 = arith.select %356, %354, %357 : vector<8x32xi1>, vector<8x32xf32>
    %359 = arith.index_cast %c3_i32_68 : i32 to index
    %c0_85 = arith.constant 0 : index
    %c0_86 = arith.constant 0 : index
    %360 = vector.load %arg6[%359, %c0_85, %c0_86] : memref<4x8x32xf32, #tpu.memory_space<vmem>>, vector<1x8x32xf32>
    %361 = vector.shape_cast %360 : vector<1x8x32xf32> to vector<8x32xf32>
    %362 = vector.shape_cast %358 : vector<8x32xf32> to vector<1x8x32xf32>
    tpu.vector_store %arg6[%359, %c0_85, %c0_86], %362 {strides = array<i32>} : memref<4x8x32xf32, #tpu.memory_space<vmem>>, vector<1x8x32xf32>,
    %363 = vector.extract_strided_slice %324 {offsets = [0, 32], sizes = [8, 32], strides = [1, 1]} : vector<8x64xf32> to vector<8x32xf32>
    %cst_87 = arith.constant 0.000000e+00 : f32
    %364 = vector.shape_cast %328 : vector<8x1xi1> to vector<8x1xi1>
    %365 = vector.broadcast %364 : vector<8x1xi1> to vector<8x32xi1>
    %366 = vector.broadcast %cst_87 : f32 to vector<8x32xf32>
    %367 = arith.select %365, %363, %366 : vector<8x32xi1>, vector<8x32xf32>
    %368 = arith.index_cast %281 : i32 to index
    %c0_88 = arith.constant 0 : index
    %c0_89 = arith.constant 0 : index
    %369 = vector.load %arg7[%368, %c0_88, %c0_89] : memref<4x8x32xf32, #tpu.memory_space<vmem>>, vector<1x8x32xf32>
    %370 = vector.shape_cast %369 : vector<1x8x32xf32> to vector<8x32xf32>
    %371 = vector.shape_cast %367 : vector<8x32xf32> to vector<1x8x32xf32>
    tpu.vector_store %arg7[%368, %c0_88, %c0_89], %371 {strides = array<i32>} : memref<4x8x32xf32, #tpu.memory_space<vmem>>, vector<1x8x32xf32>,
    %c4_i32_90 = arith.constant 4 : i32
    return
  }
  func.func @transform_0(%arg0: i32, %arg1: i32) -> (i32, i32) {
    %c0_i32 = arith.constant 0 : i32
    %c0_i32_0 = arith.constant 0 : i32
    return %arg0, %c0_i32 : i32, i32
  }
  func.func @transform_1(%arg0: i32, %arg1: i32) -> (i32, i32, i32) {
    %c0_i32 = arith.constant 0 : i32
    %c0_i32_0 = arith.constant 0 : i32
    return %arg1, %arg0, %c0_i32 : i32, i32, i32
  }
  func.func @transform_2(%arg0: i32, %arg1: i32) -> (i32, i32, i32) {
    %c2_i32 = arith.constant 2 : i32
    %0 = arith.subi %c2_i32, %arg1 : i32
    %c0_i32 = arith.constant 0 : i32
    %c0_i32_0 = arith.constant 0 : i32
    return %0, %arg0, %c0_i32 : i32, i32, i32
  }
  func.func @transform_3(%arg0: i32, %arg1: i32) -> (i32, i32) {
    %c0_i32 = arith.constant 0 : i32
    %c0_i32_0 = arith.constant 0 : i32
    %c0_i32_1 = arith.constant 0 : i32
    return %c0_i32, %c0_i32_0 : i32, i32
  }
  func.func @transform_4(%arg0: i32, %arg1: i32) -> (i32, i32, i32) {
    %c0_i32 = arith.constant 0 : i32
    %c0_i32_0 = arith.constant 0 : i32
    return %arg1, %arg0, %c0_i32 : i32, i32, i32
  }
  func.func @transform_5(%arg0: i32, %arg1: i32) -> (i32, i32, i32) {
    %c2_i32 = arith.constant 2 : i32
    %0 = arith.subi %c2_i32, %arg1 : i32
    %c0_i32 = arith.constant 0 : i32
    %c0_i32_0 = arith.constant 0 : i32
    return %0, %arg0, %c0_i32 : i32, i32, i32
  }
}

</mosaic_0001>

<llo_original>
// kernel: tpu_custom_call.1
$region0: #{tpu_custom_call.1}
  #allocation0 [shape = 'u32[]', space=smem, size = 0x4, offset = 0x4, fixed_abs, tag = 'smem constant byte address 0x4 - core index']
  #allocation1 [shape = 'u32[144,128]{1,0:T(1,128)}', space=vmem, size = 0x12000, scoped, tag = 'internal scratch']
  #allocation2 [shape = 'bf16[8,64]{1,0:T(8,128)(2,1)}', space=vmem, size = 0x800, scoped, tag = 'scratch operand']
  #allocation3 [shape = 'f32[8,64]{1,0:T(8,128)}', space=vmem, size = 0x1000, scoped, tag = 'scratch operand']
  %s0 = inlined_call_operand.vmem [shape: s32[8,1], index: 0, kind: input, shape index: {}]
  %s1 = inlined_call_operand.hbm [shape: bf16[12,8,128], index: 1, kind: input, shape index: {}]
  %s2 = inlined_call_operand.hbm [shape: bf16[12,8,128], index: 2, kind: input, shape index: {}]
  %s3 = inlined_call_operand.hbm [shape: bf16[64,256], index: 3, kind: input, shape index: {}]
  %s4 = inlined_call_operand.hbm [shape: f32[12,8,32], index: 4, kind: output, shape index: {0}]
  %s5 = inlined_call_operand.hbm [shape: f32[12,8,32], index: 5, kind: output, shape index: {1}]
  %6 = xla_tuple %s4, %s5
  %s7 = sld [smem:[#allocation0]]
  $region73: #{tpu_custom_call.1} parent=0
    _
  %s9 = ssub.s32 1, %s7
  %s10 = scalar_select 0, %s9, %s7
  $region1: #{tpu_custom_call.1} parent=0
    #allocation4 [shape = 'u8[16384]{0}', space=vmem, size = 0x4000, scoped, tag = 'input window, operand 1']
    #allocation5 [shape = 's32[2]{0}', space=sflag, size = 0x8, scoped, tag = 'scoped memory for tpu_custom_call.1']
    #allocation6 [shape = 's32[2]{0}', space=sflag, size = 0x8, scoped, tag = 'scoped memory for tpu_custom_call.1']
    #allocation7 [shape = 'u8[16384]{0}', space=vmem, size = 0x4000, scoped, tag = 'input window, operand 2']
    #allocation8 [shape = 's32[2]{0}', space=sflag, size = 0x8, scoped, tag = 'scoped memory for tpu_custom_call.1']
    #allocation9 [shape = 'u8[32768]{0}', space=vmem, size = 0x8000, scoped, tag = 'input window, operand 3, single buffered']
    #allocation10 [shape = 'u8[32768]{0}', space=vmem, size = 0x8000, scoped, tag = 'output window, operand 0']
    #allocation11 [shape = 'u8[32768]{0}', space=vmem, size = 0x8000, scoped, tag = 'output window, operand 1']
    #allocation12 [shape = 's32[2]{0}', space=sflag, size = 0x8, scoped, tag = 'scoped memory for tpu_custom_call.1']
    %11 = vsyncpa [#allocation5], 0
    %s12 = scalar_lea.sflag [#allocation5], 1
    %13 = vsyncpa %s12, 0
    %14 = vsyncpa [#allocation8], 0
    %s15 = scalar_lea.sflag [#allocation8], 1
    %16 = vsyncpa %s15, 0
    %17 = vsyncpa [#allocation6], 0
    %s18 = scalar_lea.sflag [#allocation6], 1
    %19 = vsyncpa %s18, 0
    %20 = vsyncpa [#allocation12], 0
    %s21 = scalar_lea.sflag [#allocation12], 1
    %22 = vsyncpa %s21, 0
    loop: start=0, step=1, limit=5
    $region2: #{tpu_custom_call.1} parent=1 // loop_pre_header
      _
    $region3: #{tpu_custom_call.1} parent=1 // loop_header
      %s24 = sphi 0, %s28
      %p25 = scmp.ge.s32.totalorder %s24, 5
      %s31 = sphi 0, %s43
      %s32 = sphi 0, %s39
      %s33 = sphi 0, %s31
      %s34 = sphi 0, %s32
      %s35 = sphi 0, %s33
      %s36 = sphi 0, %s34
      %s46 = sphi 0, %s48
      %s49 = sphi 0, %s46
      %s50 = sphi 0, %s49
      %s66 = sphi 0, %s50
      %s74 = sphi 0, %s76
      %s77 = sphi 0, %s74
      %s78 = sphi 0, %s77
      %s94 = sphi 0, %s78
      %s104 = sphi 0, %s106
      %s107 = sphi 0, %s104
      %s108 = sphi 0, %s107
      %s124 = sphi 0, %s108
      %s128 = sphi 0, %s128
      %s130 = sphi 0, %s128
      %s131 = sphi 0, %s130
      %s145 = sphi 0, %s131
      %s153 = sphi 0, %s155
      %s156 = sphi 0, %s153
      %s157 = sphi 0, %s156
      %s173 = sphi 0, %s157
      %s183 = sphi 0, %s185
      %s186 = sphi 0, %s183
      %s187 = sphi 0, %s186
      %s203 = sphi 0, %s187
    $region4: #{tpu_custom_call.1} parent=1 // loop_header_branch
      %27 = sbr.rel (%p25) target = $region8
    $region5: #{tpu_custom_call.1} parent=1 // loop_body
      %s29 = ssub.s32 %s24, 1
      %s30 = ssub.s32 %s24, 2
      %s37 = sadd.s32 1, %s32
      %p38 = scmp.ge.s32.totalorder %s37, 3
      %s39 = scalar_select %p38, 0, %s37
      %s40 = sadd.s32 1, %s31
      %s41 = scalar_select %p38, %s40, %s31
      %p42 = scmp.ge.s32.totalorder %s41, 1
      %s43 = scalar_select %p42, 0, %s41
      %s44 = ssub.s32 %s31, %s43
      %p45 = scmp.eq.s32.totalorder %s44, 0
      %s47 = sadd.s32 %s46, 1
      %s48 = scalar_select %p45, %s46, %s47
      %p51 = pneg %p45
      %p52 = scmp.eq.s32.totalorder %s24, 2
      %p53 = por %p51, %p52
      %p54 = scmp.ne.s32.totalorder %s46, %s49
      %p55 = scmp.eq.s32.totalorder %s24, 0
      %p56 = por %p54, %p55
      %p57 = scmp.ne.s32.totalorder %s46, %s49
      %p58 = scmp.eq.s32.totalorder %s29, 2
      %p59 = por %p57, %p58
      %p60 = scmp.ne.s32.totalorder %s49, %s50
      %p61 = scmp.eq.s32.totalorder %s29, 0
      %p62 = por %p60, %p61
      %p63 = scmp.ne.s32.totalorder %s49, %s50
      %p64 = scmp.eq.s32.totalorder %s30, 2
      %p65 = por %p63, %p64
      %p67 = scmp.ne.s32.totalorder %s50, %s66
      %p68 = scmp.eq.s32.totalorder %s30, 0
      %p69 = por %p67, %p68
      %s70 = ssub.s32 %s32, %s39
      %s71 = ssub.s32 %s31, %s43
      %s72 = sor.u32 %s70, %s71
      %p73 = scmp.eq.s32.totalorder %s72, 0
      %s75 = sadd.s32 %s74, 1
      %s76 = scalar_select %p73, %s74, %s75
      %p79 = pneg %p73
      %p80 = scmp.eq.s32.totalorder %s24, 2
      %p81 = por %p79, %p80
      %p82 = scmp.ne.s32.totalorder %s74, %s77
      %p83 = scmp.eq.s32.totalorder %s24, 0
      %p84 = por %p82, %p83
      %p85 = scmp.ne.s32.totalorder %s74, %s77
      %p86 = scmp.eq.s32.totalorder %s29, 2
      %p87 = por %p85, %p86
      %p88 = scmp.ne.s32.totalorder %s77, %s78
      %p89 = scmp.eq.s32.totalorder %s29, 0
      %p90 = por %p88, %p89
      %p91 = scmp.ne.s32.totalorder %s77, %s78
      %p92 = scmp.eq.s32.totalorder %s30, 2
      %p93 = por %p91, %p92
      %p95 = scmp.ne.s32.totalorder %s78, %s94
      %p96 = scmp.eq.s32.totalorder %s30, 0
      %p97 = por %p95, %p96
      %s98 = ssub.s32 2, %s32
      %s99 = ssub.s32 2, %s39
      %s100 = ssub.s32 %s98, %s99
      %s101 = ssub.s32 %s31, %s43
      %s102 = sor.u32 %s100, %s101
      %p103 = scmp.eq.s32.totalorder %s102, 0
      %s105 = sadd.s32 %s104, 1
      %s106 = scalar_select %p103, %s104, %s105
      %p109 = pneg %p103
      %p110 = scmp.eq.s32.totalorder %s24, 2
      %p111 = por %p109, %p110
      %p112 = scmp.ne.s32.totalorder %s104, %s107
      %p113 = scmp.eq.s32.totalorder %s24, 0
      %p114 = por %p112, %p113
      %p115 = scmp.ne.s32.totalorder %s104, %s107
      %p116 = scmp.eq.s32.totalorder %s29, 2
      %p117 = por %p115, %p116
      %p118 = scmp.ne.s32.totalorder %s107, %s108
      %p119 = scmp.eq.s32.totalorder %s29, 0
      %p120 = por %p118, %p119
      %p121 = scmp.ne.s32.totalorder %s107, %s108
      %p122 = scmp.eq.s32.totalorder %s30, 2
      %p123 = por %p121, %p122
      %p125 = scmp.ne.s32.totalorder %s108, %s124
      %p126 = scmp.eq.s32.totalorder %s30, 0
      %p127 = por %p125, %p126
      %s129 = sadd.s32 %s128, 1
      %p132 = scmp.eq.s32.totalorder %s24, 2
      %p133 = scmp.ne.s32.totalorder %s128, %s130
      %p134 = scmp.eq.s32.totalorder %s24, 0
      %p135 = por %p133, %p134
      %p136 = scmp.ne.s32.totalorder %s128, %s130
      %p137 = scmp.eq.s32.totalorder %s29, 2
      %p138 = por %p136, %p137
      %p139 = scmp.ne.s32.totalorder %s130, %s131
      %p140 = scmp.eq.s32.totalorder %s29, 0
      %p141 = por %p139, %p140
      %p142 = scmp.ne.s32.totalorder %s130, %s131
      %p143 = scmp.eq.s32.totalorder %s30, 2
      %p144 = por %p142, %p143
      %p146 = scmp.ne.s32.totalorder %s131, %s145
      %p147 = scmp.eq.s32.totalorder %s30, 0
      %p148 = por %p146, %p147
      %s149 = ssub.s32 %s32, %s39
      %s150 = ssub.s32 %s31, %s43
      %s151 = sor.u32 %s149, %s150
      %p152 = scmp.eq.s32.totalorder %s151, 0
      %s154 = sadd.s32 %s153, 1
      %s155 = scalar_select %p152, %s153, %s154
      %p158 = pneg %p152
      %p159 = scmp.eq.s32.totalorder %s24, 2
      %p160 = por %p158, %p159
      %p161 = scmp.ne.s32.totalorder %s153, %s156
      %p162 = scmp.eq.s32.totalorder %s24, 0
      %p163 = por %p161, %p162
      %p164 = scmp.ne.s32.totalorder %s153, %s156
      %p165 = scmp.eq.s32.totalorder %s29, 2
      %p166 = por %p164, %p165
      %p167 = scmp.ne.s32.totalorder %s156, %s157
      %p168 = scmp.eq.s32.totalorder %s29, 0
      %p169 = por %p167, %p168
      %p170 = scmp.ne.s32.totalorder %s156, %s157
      %p171 = scmp.eq.s32.totalorder %s30, 2
      %p172 = por %p170, %p171
      %p174 = scmp.ne.s32.totalorder %s157, %s173
      %p175 = scmp.eq.s32.totalorder %s30, 0
      %p176 = por %p174, %p175
      %s177 = ssub.s32 2, %s32
      %s178 = ssub.s32 2, %s39
      %s179 = ssub.s32 %s177, %s178
      %s180 = ssub.s32 %s31, %s43
      %s181 = sor.u32 %s179, %s180
      %p182 = scmp.eq.s32.totalorder %s181, 0
      %s184 = sadd.s32 %s183, 1
      %s185 = scalar_select %p182, %s183, %s184
      %p188 = pneg %p182
      %p189 = scmp.eq.s32.totalorder %s24, 2
      %p190 = por %p188, %p189
      %p191 = scmp.ne.s32.totalorder %s183, %s186
      %p192 = scmp.eq.s32.totalorder %s24, 0
      %p193 = por %p191, %p192
      %p194 = scmp.ne.s32.totalorder %s183, %s186
      %p195 = scmp.eq.s32.totalorder %s29, 2
      %p196 = por %p194, %p195
      %p197 = scmp.ne.s32.totalorder %s186, %s187
      %p198 = scmp.eq.s32.totalorder %s29, 0
      %p199 = por %p197, %p198
      %p200 = scmp.ne.s32.totalorder %s186, %s187
      %p201 = scmp.eq.s32.totalorder %s30, 2
      %p202 = por %p200, %p201
      %p204 = scmp.ne.s32.totalorder %s187, %s203
      %p205 = scmp.eq.s32.totalorder %s30, 0
      %p206 = por %p204, %p205
      %p207 = scmp.le.s32.totalorder 1, %s24
      %p208 = scmp.lt.s32.totalorder %s24, 4
      %p209 = pnand %p207, %p208
      %p210 = pneg %p209
      // Predicated region
      $region9: #{tpu_custom_call.1} parent=5 // pred_check
        _
      $region10: #{tpu_custom_call.1} parent=5 // pred_check_branch
        %212 = sbr.rel (%p209) target = $region12
      $region11: #{tpu_custom_call.1} parent=5 // pred_region
        %s213 = ssub.s32 %s24, 1
        // Predicated region
        $region13: #{tpu_custom_call.1} parent=11 // pred_check
          %p214 = pneg %p62
        $region14: #{tpu_custom_call.1} parent=11 // pred_check_branch
          %216 = sbr.rel (%p214) target = $region16
        $region15: #{tpu_custom_call.1} parent=11 // pred_region
          %p217 = scmp.lt.s32.totalorder %s33, 0
          %s218 = scalar_select %p217, %s33, 0
          %s219 = smul.addr %s218, 8
          %s220 = scalar_lea.vmem %s0, %s219
        $region16: #{tpu_custom_call.1} parent=11 // pred_fallthru
          _
        // Predicated region
        $region17: #{tpu_custom_call.1} parent=11 // pred_check
          %p221 = pneg %p141
        $region18: #{tpu_custom_call.1} parent=11 // pred_check_branch
          %223 = sbr.rel (%p221) target = $region20
        $region19: #{tpu_custom_call.1} parent=11 // pred_region
          %s225 = ssub.s32 1024, 1024
          %226 = vsyncadd [#allocation8], %s225
          %s227 = sshll.u32 [#allocation9], 4
          %s228 = int_to_ptr.vmem [resolvable:$true] %s227
          %233 = dma.hbm_to_vmem [thread:$0]  %s3, 1024, %s228, [#allocation8], 128, 128, 8
        $region20: #{tpu_custom_call.1} parent=11 // pred_fallthru
          _
      $region12: #{tpu_custom_call.1} parent=5 // pred_fallthru
        _
      %p234 = scmp.lt.s32.totalorder %s24, 3
      // Predicated region
      $region21: #{tpu_custom_call.1} parent=5 // pred_check
        %p235 = pneg %p234
      $region22: #{tpu_custom_call.1} parent=5 // pred_check_branch
        %237 = sbr.rel (%p235) target = $region24
      $region23: #{tpu_custom_call.1} parent=5 // pred_region
        // Predicated region
        $region25: #{tpu_custom_call.1} parent=23 // pred_check
          %p238 = pneg %p84
        $region26: #{tpu_custom_call.1} parent=23 // pred_check_branch
          %240 = sbr.rel (%p238) target = $region28
        $region27: #{tpu_custom_call.1} parent=23 // pred_region
          %s241 = sand.u32 %s74, 1
          %s242 = scalar_lea.sflag [#allocation5], %s241
          %s243 = sand.u32 %s74, 1
          %s244 = smul.addr %s243, 16
          %s245 = scalar_lea.vmem [#allocation4], %s244
          %s246 = smul.u32 4, %s32
          %s248 = ssub.s32 256, 256
          %249 = vsyncadd %s242, %s248
          %s250 = sadd.s32 %s31, %s246
          %s251 = smul.addr %s250, 64
          %s252 = scalar_lea.hbm %s1, %s251
          %s253 = sshll.u32 %s245, 4
          %s254 = int_to_ptr.vmem [resolvable:$true] %s253
          %259 = dma.hbm_to_vmem [thread:$0]  %s252, 256, %s254, %s242, 64, 64, 4
        $region28: #{tpu_custom_call.1} parent=23 // pred_fallthru
          _
        // Predicated region
        $region29: #{tpu_custom_call.1} parent=23 // pred_check
          %p260 = pneg %p114
        $region30: #{tpu_custom_call.1} parent=23 // pred_check_branch
          %262 = sbr.rel (%p260) target = $region32
        $region31: #{tpu_custom_call.1} parent=23 // pred_region
          %s263 = sand.u32 %s24, 1
          %s264 = scalar_lea.sflag [#allocation8], %s263
          %s265 = sand.u32 %s104, 1
          %s266 = smul.addr %s265, 16
          %s267 = scalar_lea.vmem [#allocation7], %s266
          %s268 = ssub.s32 2, %s32
          %s269 = smul.u32 4, %s268
          %s271 = ssub.s32 256, 256
          %272 = vsyncadd %s264, %s271
          %s273 = sadd.s32 %s31, %s269
          %s274 = smul.addr %s273, 64
          %s275 = scalar_lea.hbm %s2, %s274
          %s276 = sshll.u32 %s267, 4
          %s277 = int_to_ptr.vmem [resolvable:$true] %s276
          %282 = dma.hbm_to_vmem [thread:$0]  %s275, 256, %s277, %s264, 64, 64, 4
        $region32: #{tpu_custom_call.1} parent=23 // pred_fallthru
          _
      $region24: #{tpu_custom_call.1} parent=5 // pred_fallthru
        _
      %p283 = scmp.le.s32.totalorder 1, %s24
      %p284 = scmp.lt.s32.totalorder %s24, 4
      %p285 = pnand %p283, %p284
      %p286 = pneg %p285
      // Predicated region
      $region33: #{tpu_custom_call.1} parent=5 // pred_check
        _
      $region34: #{tpu_custom_call.1} parent=5 // pred_check_branch
        %288 = sbr.rel (%p285) target = $region36
      $region35: #{tpu_custom_call.1} parent=5 // pred_region
        %s289 = ssub.s32 %s24, 1
        %s290 = sand.u32 %s77, 1
        %s291 = scalar_lea.sflag [#allocation5], %s290
        %s292 = sand.u32 %s77, 1
        %s293 = smul.addr %s292, 16
        %s294 = scalar_lea.vmem [#allocation4], %s293
        // Predicated region
        $region37: #{tpu_custom_call.1} parent=35 // pred_check
          %p295 = pneg %p90
        $region38: #{tpu_custom_call.1} parent=35 // pred_check_branch
          %297 = sbr.rel (%p295) target = $region40
        $region39: #{tpu_custom_call.1} parent=35 // pred_region
          %298 = dma.done %s291, 256
        $region40: #{tpu_custom_call.1} parent=35 // pred_fallthru
          _
        %s299 = sand.u32 %s29, 1
        %s300 = scalar_lea.sflag [#allocation8], %s299
        %s301 = sand.u32 %s107, 1
        %s302 = smul.addr %s301, 16
        %s303 = scalar_lea.vmem [#allocation7], %s302
        // Predicated region
        $region41: #{tpu_custom_call.1} parent=35 // pred_check
          %p304 = pneg %p120
        $region42: #{tpu_custom_call.1} parent=35 // pred_check_branch
          %306 = sbr.rel (%p304) target = $region44
        $region43: #{tpu_custom_call.1} parent=35 // pred_region
          %307 = dma.done %s300, 256
        $region44: #{tpu_custom_call.1} parent=35 // pred_fallthru
          _
        // Predicated region
        $region45: #{tpu_custom_call.1} parent=35 // pred_check
          %p308 = pneg %p141
        $region46: #{tpu_custom_call.1} parent=35 // pred_check_branch
          %310 = sbr.rel (%p308) target = $region48
        $region47: #{tpu_custom_call.1} parent=35 // pred_region
          %311 = dma.done [#allocation8], 1024
        $region48: #{tpu_custom_call.1} parent=35 // pred_fallthru
          _
        %p312 = scmp.lt.s32.totalorder %s33, 0
        %s313 = scalar_select %p312, %s33, 0
        %s314 = smul.addr %s313, 8
        %s315 = scalar_lea.vmem %s0, %s314
        %p316 = pneg %p62
        %p317 = pneg %p59
        %s318 = sand.u32 %s77, 1
        %s319 = scalar_lea.sflag [#allocation5], %s318
        %s320 = sand.u32 %s77, 1
        %s321 = smul.addr %s320, 16
        %s322 = scalar_lea.vmem [#allocation4], %s321
        %p323 = pneg %p90
        %p324 = pneg %p87
        %s325 = sand.u32 %s29, 1
        %s326 = scalar_lea.sflag [#allocation8], %s325
        %s327 = sand.u32 %s107, 1
        %s328 = smul.addr %s327, 16
        %s329 = scalar_lea.vmem [#allocation7], %s328
        %p330 = pneg %p120
        %p331 = pneg %p117
        %p332 = pneg %p141
        %p333 = pneg %p138
        %p334 = pneg %p169
        %p335 = pneg %p166
        %s336 = sand.u32 %s156, 1
        %s337 = scalar_lea.sflag [#allocation6], %s336
        %s338 = sand.u32 %s156, 1
        %s339 = smul.addr %s338, 32
        %s340 = scalar_lea.vmem [#allocation10], %s339
        %p341 = pneg %p199
        %p342 = pneg %p196
        %s343 = sand.u32 %s186, 1
        %s344 = scalar_lea.sflag [#allocation12], %s343
        %s345 = sand.u32 %s186, 1
        %s346 = smul.addr %s345, 32
        %s347 = scalar_lea.vmem [#allocation11], %s346
        %p348 = scmp.lt.s32.totalorder %s33, 0
        %s349 = scalar_select %p348, %s33, 0
        %s350 = smul.addr %s349, 8
        %s351 = scalar_lea.vmem %s0, %s350
        %s352 = smul.u32 4, %s34
        %s353 = ssub.s32 2, %s34
        %s354 = smul.u32 4, %s353
        %s355 = smul.u32 4, %s34
        %s356 = ssub.s32 2, %s34
        %s357 = smul.u32 4, %s356
        %p359 = scmp.eq.s32.totalorder %s34, 0
        // Predicated region
        $region49: #{tpu_custom_call.1} parent=35 // pred_check
          %p360 = pneg %p359
        $region50: #{tpu_custom_call.1} parent=35 // pred_check_branch
          %362 = sbr.rel (%p360) target = $region52
        $region51: #{tpu_custom_call.1} parent=35 // pred_region
          %vm363 = vcmask 519168
          %364 = vst.msk [vmem:[#allocation2] sm:$0xf] %vm363, 0
          %vm365 = vcmask 523264
          %366 = vst.msk [vmem:[#allocation3] sm:$0xff] %vm365, 0.0
        $region52: #{tpu_custom_call.1} parent=35 // pred_fallthru
          _
        %v367 = vld [vmem:[%s351] sm:$0xff]
        %v368 = vld [vmem:[#allocation9] sm:$0xff]
        %v369 = vld [vmem:[#allocation9 + $0x8] sm:$0xff]
        %v370 = vld [vmem:[#allocation9 + $0x10] sm:$0xff]
        %v371 = vld [vmem:[#allocation9 + $0x18] sm:$0xff]
        %v372 = vld [vmem:[#allocation9 + $0x20] sm:$0xff]
        %v373 = vld [vmem:[#allocation9 + $0x28] sm:$0xff]
        %v374 = vld [vmem:[#allocation9 + $0x30] sm:$0xff]
        %v375 = vld [vmem:[#allocation9 + $0x38] sm:$0xff]
        %s376 = smul.u32 %s34, 4
        %s377 = ssub.s32 2, %s34
        %s378 = smul.u32 %s377, 4
        %s379 = sadd.s32 %s378, 3
        %v380 = vld [vmem:[#allocation2] sm:$0xf]
        %v381 = vld [vmem:[#allocation3] sm:$0xff]
        %v390 = vunpack.c.l.b16 %v368
        %v391 = vunpack.c.h.b16 %v368
        %v392 = vunpack.c.l.b16 %v369
        %v393 = vunpack.c.h.b16 %v369
        %v394 = vunpack.c.l.b16 %v370
        %v395 = vunpack.c.h.b16 %v370
        %v396 = vunpack.c.l.b16 %v371
        %v397 = vunpack.c.h.b16 %v371
        %v398 = vunpack.c.l.b16 %v372
        %v399 = vunpack.c.h.b16 %v372
        %v400 = vunpack.c.l.b16 %v373
        %v401 = vunpack.c.h.b16 %v373
        %v402 = vunpack.c.l.b16 %v374
        %v403 = vunpack.c.h.b16 %v374
        %v404 = vunpack.c.l.b16 %v375
        %v405 = vunpack.c.h.b16 %v375
        %v406 = vpack.c.b16 %v392, %v390
        %v407 = vpack.c.b16 %v393, %v391
        %v408 = vpack.c.b16 %v396, %v394
        %v409 = vpack.c.b16 %v397, %v395
        %v410 = vpack.c.b16 %v400, %v398
        %v411 = vpack.c.b16 %v401, %v399
        %v412 = vpack.c.b16 %v404, %v402
        %v413 = vpack.c.b16 %v405, %v403
        %vm422 = vcmask 523264
        %v424 = vsel %vm422, %v380, 0
        %426 = vmatprep.subr.bf16.mxu0 %v407
        %427 = vmatpush1.bf16.msra.mxu0 %v406
        %428 = vmatprep.subr.bf16.mxu0 %v409
        %429 = vmatpush1.bf16.msra.mxu0 %v408
        %430 = vmatprep.subr.bf16.mxu0 %v411
        %431 = vmatpush1.bf16.msra.mxu0 %v410
        %432 = vmatprep.subr.bf16.mxu0 %v413
        %433 = vmatpush1.bf16.msra.mxu0 %v412
        %434 = vmatprep.subr.bf16.mxu0 0
        %435 = vmatpush1.bf16.msra.mxu0 0
        %436 = vmatprep.subr.bf16.mxu0 0
        %437 = vmatpush1.bf16.msra.mxu0 0
        %438 = vmatprep.subr.bf16.mxu0 0
        %439 = vmatpush1.bf16.msra.mxu0 0
        %440 = vmatprep.subr.bf16.mxu0 0
        %441 = vmatpush1.bf16.msra.mxu0 0
        %442 = vmatprep.subr.bf16.mxu0 0
        %443 = vmatpush1.bf16.msra.mxu0 0
        %444 = vmatprep.subr.bf16.mxu0 0
        %445 = vmatpush1.bf16.msra.mxu0 0
        %446 = vmatprep.subr.bf16.mxu0 0
        %447 = vmatpush1.bf16.msra.mxu0 0
        %448 = vmatprep.subr.bf16.mxu0 0
        %449 = vmatpush1.bf16.msra.mxu0 0
        %450 = vmatprep.subr.bf16.mxu0 0
        %451 = vmatpush1.bf16.msra.mxu0 0
        %452 = vmatprep.subr.bf16.mxu0 0
        %453 = vmatpush1.bf16.msra.mxu0 0
        %454 = vmatprep.subr.bf16.mxu0 0
        %455 = vmatpush1.bf16.msra.mxu0 0
        %456 = vmatprep.subr.bf16.mxu0 0
        %457 = vmatpush1.bf16.msra.mxu0 0
        %458 = vmatprep.mubr.bf16.mxu0 0
        %459 = vmatmul.mubr.bf16.gmra.mrb[0].mxu0 %v424
        %v460 = vpop.f32.mrb[0].mxu0
        %v461 = vadd.f32 0.0, %v460
        %v462 = vpop.f32.mrb[0].mxu0
        %v463 = vadd.f32 0.0, %v462
        %v464 = vpop.f32.mrb[0].mxu0
        %v465 = vpop.f32.mrb[0].mxu0
        %466 = vdwg.mxu0
        %v467 = vld [vmem:[%s294] sm:$0xf]
        %v468 = vunpack.c.l.bf16 %v467
        %v469 = vadd.f32 %v461, %v468
        %s470 = scalar_lea.vmem %s303, 12 [#allocation7]
        %v471 = vld [vmem:[%s470] sm:$0xf]
        %v472 = vunpack.c.l.bf16 %v471
        %v473 = vadd.f32 %v463, %v472
        %475 = vrot.lane.b32.xlu0 %v473, 96
        %v476 = vpop.permute.xlu0 %475
        %vm478 = vcmask 785408
        %v479 = vsel %vm478, %v469, %v476
        %v480 = vxor.u32 %v479, 2147483648
        %v481 = vxor.u32 %v476, 2147483648
        %v482 = vmul.f32 %v480, 1.442695
        %v483 = vpow.pop %v482
        %v484 = vmul.f32 %v481, 1.442695
        %v485 = vpow.pop %v484
        %v486 = vadd.f32 %v483, 1.0
        %v487 = vadd.f32 %v485, 1.0
        %v488 = vrcp.pop %v486
        %v489 = vmul.f32 1.0, %v488
        %v490 = vrcp.pop %v487
        %v491 = vmul.f32 1.0, %v490
        %493 = vrot.lane.b32.xlu0 %v469, 32
        %v494 = vpop.permute.xlu0 %493
        %496 = vrot.lane.b32.xlu0 %v473, 64
        %v497 = vpop.permute.xlu0 %496
        %vm499 = vcmask 261120
        %v500 = vsel %vm499, %v494, %v497
        %v501 = vtanh.pop %v500
        %503 = vrot.lane.b32.xlu0 %v489, 64
        %v504 = vpop.permute.xlu0 %503
        %v506 = vsel %vm499, %v489, %v504
        %507 = vrot.lane.b32.xlu0 %v489, 96
        %v508 = vpop.permute.xlu0 %507
        %511 = vrot.lane.b32.xlu0 %v491, 32
        %v512 = vpop.permute.xlu0 %511
        %v514 = vsel %vm499, %v508, %v512
        %v515 = vsel %vm499, %v504, %v491
        %v516 = vmul.f32 %v514, %v381
        %v517 = vmul.f32 %v506, %v501
        %v518 = vadd.f32 %v516, %v517
        %v519 = vtanh.pop %v518
        %v520 = vmul.f32 %v515, %v519
        %v521 = vstv %s376
        %vm522 = vcmp.lt.s32.totalorder %v521, %v367
        %v523 = vstv %s379
        %vm524 = vcmp.lt.s32.totalorder %v523, %v367
        %v525 = vpack.c.bf16 %v520, %v520
        %v526 = vsel %vm522, 1, 0
        %527 = vset.pattern.permute.xlu0 0
        %528 = vperm.xlu0 %527, %v526
        %v529 = vpop.permute.xlu0 %528
        %vm530 = vcmp.eq.s32.totalorder %v529, 1
        %vm531 = vmpackc.low %vm530, %vm530
        %v532 = vsel %vm531, %v525, %v380
        %v533 = vsel %vm524, 1, 0
        %534 = vset.pattern.permute.xlu0 0
        %535 = vperm.xlu0 %534, %v533
        %v536 = vpop.permute.xlu0 %535
        %vm537 = vcmp.eq.s32.totalorder %v536, 1
        %vm538 = vmpackc.low %vm537, %vm537
        %v539 = vsel %vm538, %v525, %v380
        %v542 = vsel %vm499, %v532, %v539
        %vm544 = vcmask 519168
        %545 = vst.msk [vmem:[#allocation2] sm:$0xf] %vm544, %v542
        %v546 = vsel %vm530, %v518, %v381
        %v547 = vsel %vm537, %v518, %v381
        %v548 = vsel %vm499, %v546, %v547
        %549 = vst.msk [vmem:[#allocation3] sm:$0xff] %vm422, %v548
        %v550 = vsel %vm530, %v520, 0.0
        %551 = vst.msk [vmem:[%s340] sm:$0xff] %vm499, %v550
        %v552 = vsel %vm537, %v520, 0.0
        %554 = vrot.lane.b32.xlu0 %v552, 96
        %v555 = vpop.permute.xlu0 %554
        %s557 = scalar_lea.vmem %s347, 24 [#allocation11]
        %558 = vst.msk [vmem:[%s557] sm:$0xff] %vm499, %v555
        %s559 = sadd.s32 %s376, 1
        %s560 = sadd.s32 %s378, 2
        %v561 = vld [vmem:[#allocation2] sm:$0xf]
        %v562 = vld [vmem:[#allocation3] sm:$0xff]
        %v564 = vsel %vm422, %v561, 0
        %566 = vmatprep.subr.bf16.mxu0 %v407
        %567 = vmatpush1.bf16.msra.mxu0 %v406
        %568 = vmatprep.subr.bf16.mxu0 %v409
        %569 = vmatpush1.bf16.msra.mxu0 %v408
        %570 = vmatprep.subr.bf16.mxu0 %v411
        %571 = vmatpush1.bf16.msra.mxu0 %v410
        %572 = vmatprep.subr.bf16.mxu0 %v413
        %573 = vmatpush1.bf16.msra.mxu0 %v412
        %574 = vmatprep.subr.bf16.mxu0 0
        %575 = vmatpush1.bf16.msra.mxu0 0
        %576 = vmatprep.subr.bf16.mxu0 0
        %577 = vmatpush1.bf16.msra.mxu0 0
        %578 = vmatprep.subr.bf16.mxu0 0
        %579 = vmatpush1.bf16.msra.mxu0 0
        %580 = vmatprep.subr.bf16.mxu0 0
        %581 = vmatpush1.bf16.msra.mxu0 0
        %582 = vmatprep.subr.bf16.mxu0 0
        %583 = vmatpush1.bf16.msra.mxu0 0
        %584 = vmatprep.subr.bf16.mxu0 0
        %585 = vmatpush1.bf16.msra.mxu0 0
        %586 = vmatprep.subr.bf16.mxu0 0
        %587 = vmatpush1.bf16.msra.mxu0 0
        %588 = vmatprep.subr.bf16.mxu0 0
        %589 = vmatpush1.bf16.msra.mxu0 0
        %590 = vmatprep.subr.bf16.mxu0 0
        %591 = vmatpush1.bf16.msra.mxu0 0
        %592 = vmatprep.subr.bf16.mxu0 0
        %593 = vmatpush1.bf16.msra.mxu0 0
        %594 = vmatprep.subr.bf16.mxu0 0
        %595 = vmatpush1.bf16.msra.mxu0 0
        %596 = vmatprep.subr.bf16.mxu0 0
        %597 = vmatpush1.bf16.msra.mxu0 0
        %598 = vmatprep.mubr.bf16.mxu0 0
        %599 = vmatmul.mubr.bf16.gmra.mrb[0].mxu0 %v564
        %v600 = vpop.f32.mrb[0].mxu0
        %v601 = vadd.f32 0.0, %v600
        %v602 = vpop.f32.mrb[0].mxu0
        %v603 = vadd.f32 0.0, %v602
        %v604 = vpop.f32.mrb[0].mxu0
        %v605 = vpop.f32.mrb[0].mxu0
        %606 = vdwg.mxu0
        %s607 = scalar_lea.vmem %s294, 4 [#allocation4]
        %v608 = vld [vmem:[%s607] sm:$0xf]
        %v609 = vunpack.c.l.bf16 %v608
        %v610 = vadd.f32 %v601, %v609
        %s611 = scalar_lea.vmem %s303, 8 [#allocation7]
        %v612 = vld [vmem:[%s611] sm:$0xf]
        %v613 = vunpack.c.l.bf16 %v612
        %v614 = vadd.f32 %v603, %v613
        %616 = vrot.lane.b32.xlu0 %v614, 96
        %v617 = vpop.permute.xlu0 %616
        %v619 = vsel %vm478, %v610, %v617
        %v620 = vxor.u32 %v619, 2147483648
        %v621 = vxor.u32 %v617, 2147483648
        %v622 = vmul.f32 %v620, 1.442695
        %v623 = vpow.pop %v622
        %v624 = vmul.f32 %v621, 1.442695
        %v625 = vpow.pop %v624
        %v626 = vadd.f32 %v623, 1.0
        %v627 = vadd.f32 %v625, 1.0
        %v628 = vrcp.pop %v626
        %v629 = vmul.f32 1.0, %v628
        %v630 = vrcp.pop %v627
        %v631 = vmul.f32 1.0, %v630
        %633 = vrot.lane.b32.xlu0 %v610, 32
        %v634 = vpop.permute.xlu0 %633
        %636 = vrot.lane.b32.xlu0 %v614, 64
        %v637 = vpop.permute.xlu0 %636
        %v639 = vsel %vm499, %v634, %v637
        %v640 = vtanh.pop %v639
        %642 = vrot.lane.b32.xlu0 %v629, 64
        %v643 = vpop.permute.xlu0 %642
        %v645 = vsel %vm499, %v629, %v643
        %646 = vrot.lane.b32.xlu0 %v629, 96
        %v647 = vpop.permute.xlu0 %646
        %650 = vrot.lane.b32.xlu0 %v631, 32
        %v651 = vpop.permute.xlu0 %650
        %v653 = vsel %vm499, %v647, %v651
        %v654 = vsel %vm499, %v643, %v631
        %v655 = vmul.f32 %v653, %v562
        %v656 = vmul.f32 %v645, %v640
        %v657 = vadd.f32 %v655, %v656
        %v658 = vtanh.pop %v657
        %v659 = vmul.f32 %v654, %v658
        %v660 = vstv %s559
        %vm661 = vcmp.lt.s32.totalorder %v660, %v367
        %v662 = vstv %s560
        %vm663 = vcmp.lt.s32.totalorder %v662, %v367
        %v664 = vpack.c.bf16 %v659, %v659
        %v665 = vsel %vm661, 1, 0
        %666 = vset.pattern.permute.xlu0 0
        %667 = vperm.xlu0 %666, %v665
        %v668 = vpop.permute.xlu0 %667
        %vm669 = vcmp.eq.s32.totalorder %v668, 1
        %vm670 = vmpackc.low %vm669, %vm669
        %v671 = vsel %vm670, %v664, %v561
        %v672 = vsel %vm663, 1, 0
        %673 = vset.pattern.permute.xlu0 0
        %674 = vperm.xlu0 %673, %v672
        %v675 = vpop.permute.xlu0 %674
        %vm676 = vcmp.eq.s32.totalorder %v675, 1
        %vm677 = vmpackc.low %vm676, %vm676
        %v678 = vsel %vm677, %v664, %v561
        %v681 = vsel %vm499, %v671, %v678
        %683 = vst.msk [vmem:[#allocation2] sm:$0xf] %vm544, %v681
        %v684 = vsel %vm669, %v657, %v562
        %v685 = vsel %vm676, %v657, %v562
        %v686 = vsel %vm499, %v684, %v685
        %687 = vst.msk [vmem:[#allocation3] sm:$0xff] %vm422, %v686
        %v688 = vsel %vm669, %v659, 0.0
        %s689 = scalar_lea.vmem %s340, 8 [#allocation10]
        %690 = vst.msk [vmem:[%s689] sm:$0xff] %vm499, %v688
        %v691 = vsel %vm676, %v659, 0.0
        %693 = vrot.lane.b32.xlu0 %v691, 96
        %v694 = vpop.permute.xlu0 %693
        %s696 = scalar_lea.vmem %s347, 16 [#allocation11]
        %697 = vst.msk [vmem:[%s696] sm:$0xff] %vm499, %v694
        %s698 = sadd.s32 %s376, 2
        %s699 = sadd.s32 %s378, 1
        %v700 = vld [vmem:[#allocation2] sm:$0xf]
        %v701 = vld [vmem:[#allocation3] sm:$0xff]
        %v703 = vsel %vm422, %v700, 0
        %705 = vmatprep.subr.bf16.mxu0 %v407
        %706 = vmatpush1.bf16.msra.mxu0 %v406
        %707 = vmatprep.subr.bf16.mxu0 %v409
        %708 = vmatpush1.bf16.msra.mxu0 %v408
        %709 = vmatprep.subr.bf16.mxu0 %v411
        %710 = vmatpush1.bf16.msra.mxu0 %v410
        %711 = vmatprep.subr.bf16.mxu0 %v413
        %712 = vmatpush1.bf16.msra.mxu0 %v412
        %713 = vmatprep.subr.bf16.mxu0 0
        %714 = vmatpush1.bf16.msra.mxu0 0
        %715 = vmatprep.subr.bf16.mxu0 0
        %716 = vmatpush1.bf16.msra.mxu0 0
        %717 = vmatprep.subr.bf16.mxu0 0
        %718 = vmatpush1.bf16.msra.mxu0 0
        %719 = vmatprep.subr.bf16.mxu0 0
        %720 = vmatpush1.bf16.msra.mxu0 0
        %721 = vmatprep.subr.bf16.mxu0 0
        %722 = vmatpush1.bf16.msra.mxu0 0
        %723 = vmatprep.subr.bf16.mxu0 0
        %724 = vmatpush1.bf16.msra.mxu0 0
        %725 = vmatprep.subr.bf16.mxu0 0
        %726 = vmatpush1.bf16.msra.mxu0 0
        %727 = vmatprep.subr.bf16.mxu0 0
        %728 = vmatpush1.bf16.msra.mxu0 0
        %729 = vmatprep.subr.bf16.mxu0 0
        %730 = vmatpush1.bf16.msra.mxu0 0
        %731 = vmatprep.subr.bf16.mxu0 0
        %732 = vmatpush1.bf16.msra.mxu0 0
        %733 = vmatprep.subr.bf16.mxu0 0
        %734 = vmatpush1.bf16.msra.mxu0 0
        %735 = vmatprep.subr.bf16.mxu0 0
        %736 = vmatpush1.bf16.msra.mxu0 0
        %737 = vmatprep.mubr.bf16.mxu0 0
        %738 = vmatmul.mubr.bf16.gmra.mrb[0].mxu0 %v703
        %v739 = vpop.f32.mrb[0].mxu0
        %v740 = vadd.f32 0.0, %v739
        %v741 = vpop.f32.mrb[0].mxu0
        %v742 = vadd.f32 0.0, %v741
        %v743 = vpop.f32.mrb[0].mxu0
        %v744 = vpop.f32.mrb[0].mxu0
        %745 = vdwg.mxu0
        %s746 = scalar_lea.vmem %s294, 8 [#allocation4]
        %v747 = vld [vmem:[%s746] sm:$0xf]
        %v748 = vunpack.c.l.bf16 %v747
        %v749 = vadd.f32 %v740, %v748
        %s750 = scalar_lea.vmem %s303, 4 [#allocation7]
        %v751 = vld [vmem:[%s750] sm:$0xf]
        %v752 = vunpack.c.l.bf16 %v751
        %v753 = vadd.f32 %v742, %v752
        %755 = vrot.lane.b32.xlu0 %v753, 96
        %v756 = vpop.permute.xlu0 %755
        %v758 = vsel %vm478, %v749, %v756
        %v759 = vxor.u32 %v758, 2147483648
        %v760 = vxor.u32 %v756, 2147483648
        %v761 = vmul.f32 %v759, 1.442695
        %v762 = vpow.pop %v761
        %v763 = vmul.f32 %v760, 1.442695
        %v764 = vpow.pop %v763
        %v765 = vadd.f32 %v762, 1.0
        %v766 = vadd.f32 %v764, 1.0
        %v767 = vrcp.pop %v765
        %v768 = vmul.f32 1.0, %v767
        %v769 = vrcp.pop %v766
        %v770 = vmul.f32 1.0, %v769
        %772 = vrot.lane.b32.xlu0 %v749, 32
        %v773 = vpop.permute.xlu0 %772
        %775 = vrot.lane.b32.xlu0 %v753, 64
        %v776 = vpop.permute.xlu0 %775
        %v778 = vsel %vm499, %v773, %v776
        %v779 = vtanh.pop %v778
        %781 = vrot.lane.b32.xlu0 %v768, 64
        %v782 = vpop.permute.xlu0 %781
        %v784 = vsel %vm499, %v768, %v782
        %785 = vrot.lane.b32.xlu0 %v768, 96
        %v786 = vpop.permute.xlu0 %785
        %789 = vrot.lane.b32.xlu0 %v770, 32
        %v790 = vpop.permute.xlu0 %789
        %v792 = vsel %vm499, %v786, %v790
        %v793 = vsel %vm499, %v782, %v770
        %v794 = vmul.f32 %v792, %v701
        %v795 = vmul.f32 %v784, %v779
        %v796 = vadd.f32 %v794, %v795
        %v797 = vtanh.pop %v796
        %v798 = vmul.f32 %v793, %v797
        %v799 = vstv %s698
        %vm800 = vcmp.lt.s32.totalorder %v799, %v367
        %v801 = vstv %s699
        %vm802 = vcmp.lt.s32.totalorder %v801, %v367
        %v803 = vpack.c.bf16 %v798, %v798
        %v804 = vsel %vm800, 1, 0
        %805 = vset.pattern.permute.xlu0 0
        %806 = vperm.xlu0 %805, %v804
        %v807 = vpop.permute.xlu0 %806
        %vm808 = vcmp.eq.s32.totalorder %v807, 1
        %vm809 = vmpackc.low %vm808, %vm808
        %v810 = vsel %vm809, %v803, %v700
        %v811 = vsel %vm802, 1, 0
        %812 = vset.pattern.permute.xlu0 0
        %813 = vperm.xlu0 %812, %v811
        %v814 = vpop.permute.xlu0 %813
        %vm815 = vcmp.eq.s32.totalorder %v814, 1
        %vm816 = vmpackc.low %vm815, %vm815
        %v817 = vsel %vm816, %v803, %v700
        %v820 = vsel %vm499, %v810, %v817
        %822 = vst.msk [vmem:[#allocation2] sm:$0xf] %vm544, %v820
        %v823 = vsel %vm808, %v796, %v701
        %v824 = vsel %vm815, %v796, %v701
        %v825 = vsel %vm499, %v823, %v824
        %826 = vst.msk [vmem:[#allocation3] sm:$0xff] %vm422, %v825
        %v827 = vsel %vm808, %v798, 0.0
        %s828 = scalar_lea.vmem %s340, 16 [#allocation10]
        %829 = vst.msk [vmem:[%s828] sm:$0xff] %vm499, %v827
        %v830 = vsel %vm815, %v798, 0.0
        %832 = vrot.lane.b32.xlu0 %v830, 96
        %v833 = vpop.permute.xlu0 %832
        %s835 = scalar_lea.vmem %s347, 8 [#allocation11]
        %836 = vst.msk [vmem:[%s835] sm:$0xff] %vm499, %v833
        %s837 = sadd.s32 %s376, 3
        %v838 = vld [vmem:[#allocation2] sm:$0xf]
        %v839 = vld [vmem:[#allocation3] sm:$0xff]
        %v841 = vsel %vm422, %v838, 0
        %843 = vmatprep.subr.bf16.mxu0 %v407
        %844 = vmatpush1.bf16.msra.mxu0 %v406
        %845 = vmatprep.subr.bf16.mxu0 %v409
        %846 = vmatpush1.bf16.msra.mxu0 %v408
        %847 = vmatprep.subr.bf16.mxu0 %v411
        %848 = vmatpush1.bf16.msra.mxu0 %v410
        %849 = vmatprep.subr.bf16.mxu0 %v413
        %850 = vmatpush1.bf16.msra.mxu0 %v412
        %851 = vmatprep.subr.bf16.mxu0 0
        %852 = vmatpush1.bf16.msra.mxu0 0
        %853 = vmatprep.subr.bf16.mxu0 0
        %854 = vmatpush1.bf16.msra.mxu0 0
        %855 = vmatprep.subr.bf16.mxu0 0
        %856 = vmatpush1.bf16.msra.mxu0 0
        %857 = vmatprep.subr.bf16.mxu0 0
        %858 = vmatpush1.bf16.msra.mxu0 0
        %859 = vmatprep.subr.bf16.mxu0 0
        %860 = vmatpush1.bf16.msra.mxu0 0
        %861 = vmatprep.subr.bf16.mxu0 0
        %862 = vmatpush1.bf16.msra.mxu0 0
        %863 = vmatprep.subr.bf16.mxu0 0
        %864 = vmatpush1.bf16.msra.mxu0 0
        %865 = vmatprep.subr.bf16.mxu0 0
        %866 = vmatpush1.bf16.msra.mxu0 0
        %867 = vmatprep.subr.bf16.mxu0 0
        %868 = vmatpush1.bf16.msra.mxu0 0
        %869 = vmatprep.subr.bf16.mxu0 0
        %870 = vmatpush1.bf16.msra.mxu0 0
        %871 = vmatprep.subr.bf16.mxu0 0
        %872 = vmatpush1.bf16.msra.mxu0 0
        %873 = vmatprep.subr.bf16.mxu0 0
        %874 = vmatpush1.bf16.msra.mxu0 0
        %875 = vmatprep.mubr.bf16.mxu0 0
        %876 = vmatmul.mubr.bf16.gmra.mrb[0].mxu0 %v841
        %v877 = vpop.f32.mrb[0].mxu0
        %v878 = vadd.f32 0.0, %v877
        %v879 = vpop.f32.mrb[0].mxu0
        %v880 = vadd.f32 0.0, %v879
        %v881 = vpop.f32.mrb[0].mxu0
        %v882 = vpop.f32.mrb[0].mxu0
        %883 = vdwg.mxu0
        %s884 = scalar_lea.vmem %s294, 12 [#allocation4]
        %v885 = vld [vmem:[%s884] sm:$0xf]
        %v886 = vunpack.c.l.bf16 %v885
        %v887 = vadd.f32 %v878, %v886
        %v888 = vld [vmem:[%s303] sm:$0xf]
        %v889 = vunpack.c.l.bf16 %v888
        %v890 = vadd.f32 %v880, %v889
        %892 = vrot.lane.b32.xlu0 %v890, 96
        %v893 = vpop.permute.xlu0 %892
        %v895 = vsel %vm478, %v887, %v893
        %v896 = vxor.u32 %v895, 2147483648
        %v897 = vxor.u32 %v893, 2147483648
        %v898 = vmul.f32 %v896, 1.442695
        %v899 = vpow.pop %v898
        %v900 = vmul.f32 %v897, 1.442695
        %v901 = vpow.pop %v900
        %v902 = vadd.f32 %v899, 1.0
        %v903 = vadd.f32 %v901, 1.0
        %v904 = vrcp.pop %v902
        %v905 = vmul.f32 1.0, %v904
        %v906 = vrcp.pop %v903
        %v907 = vmul.f32 1.0, %v906
        %909 = vrot.lane.b32.xlu0 %v887, 32
        %v910 = vpop.permute.xlu0 %909
        %912 = vrot.lane.b32.xlu0 %v890, 64
        %v913 = vpop.permute.xlu0 %912
        %v915 = vsel %vm499, %v910, %v913
        %v916 = vtanh.pop %v915
        %918 = vrot.lane.b32.xlu0 %v905, 64
        %v919 = vpop.permute.xlu0 %918
        %v921 = vsel %vm499, %v905, %v919
        %922 = vrot.lane.b32.xlu0 %v905, 96
        %v923 = vpop.permute.xlu0 %922
        %926 = vrot.lane.b32.xlu0 %v907, 32
        %v927 = vpop.permute.xlu0 %926
        %v929 = vsel %vm499, %v923, %v927
        %v930 = vsel %vm499, %v919, %v907
        %v931 = vmul.f32 %v929, %v839
        %v932 = vmul.f32 %v921, %v916
        %v933 = vadd.f32 %v931, %v932
        %v934 = vtanh.pop %v933
        %v935 = vmul.f32 %v930, %v934
        %v936 = vstv %s837
        %vm937 = vcmp.lt.s32.totalorder %v936, %v367
        %v938 = vstv %s378
        %vm939 = vcmp.lt.s32.totalorder %v938, %v367
        %v940 = vpack.c.bf16 %v935, %v935
        %v941 = vsel %vm937, 1, 0
        %942 = vset.pattern.permute.xlu0 0
        %943 = vperm.xlu0 %942, %v941
        %v944 = vpop.permute.xlu0 %943
        %vm945 = vcmp.eq.s32.totalorder %v944, 1
        %vm946 = vmpackc.low %vm945, %vm945
        %v947 = vsel %vm946, %v940, %v838
        %v948 = vsel %vm939, 1, 0
        %949 = vset.pattern.permute.xlu0 0
        %950 = vperm.xlu0 %949, %v948
        %v951 = vpop.permute.xlu0 %950
        %vm952 = vcmp.eq.s32.totalorder %v951, 1
        %vm953 = vmpackc.low %vm952, %vm952
        %v954 = vsel %vm953, %v940, %v838
        %v957 = vsel %vm499, %v947, %v954
        %959 = vst.msk [vmem:[#allocation2] sm:$0xf] %vm544, %v957
        %v960 = vsel %vm945, %v933, %v839
        %v961 = vsel %vm952, %v933, %v839
        %v962 = vsel %vm499, %v960, %v961
        %963 = vst.msk [vmem:[#allocation3] sm:$0xff] %vm422, %v962
        %v964 = vsel %vm945, %v935, 0.0
        %s965 = scalar_lea.vmem %s340, 24 [#allocation10]
        %966 = vst.msk [vmem:[%s965] sm:$0xff] %vm499, %v964
        %v967 = vsel %vm952, %v935, 0.0
        %969 = vrot.lane.b32.xlu0 %v967, 96
        %v970 = vpop.permute.xlu0 %969
        %972 = vst.msk [vmem:[%s347] sm:$0xff] %vm499, %v970
        %s973 = sand.u32 %s156, 1
        %s974 = scalar_lea.sflag [#allocation6], %s973
        %s975 = sand.u32 %s156, 1
        %s976 = smul.addr %s975, 32
        %s977 = scalar_lea.vmem [#allocation10], %s976
        %s978 = sand.u32 %s186, 1
        %s979 = scalar_lea.sflag [#allocation12], %s978
        %s980 = sand.u32 %s186, 1
        %s981 = smul.addr %s980, 32
        %s982 = scalar_lea.vmem [#allocation11], %s981
        // Predicated region
        $region53: #{tpu_custom_call.1} parent=35 // pred_check
          %p983 = pneg %p166
        $region54: #{tpu_custom_call.1} parent=35 // pred_check_branch
          %985 = sbr.rel (%p983) target = $region56
        $region55: #{tpu_custom_call.1} parent=35 // pred_region
          %s986 = smul.u32 4, %s34
          %s988 = ssub.s32 512, 512
          %989 = vsyncadd %s974, %s988
          %s990 = sadd.s32 %s33, %s986
          %s991 = smul.addr %s990, 128
          %s992 = scalar_lea.hbm %s4, %s991
          %s993 = sshll.u32 %s977, 4
          %s994 = int_to_ptr.vmem [resolvable:$true] %s993
          %999 = dma.vmem_to_hbm [thread:$0]  %s994, 512, %s992, %s974, 128, 128, 8
        $region56: #{tpu_custom_call.1} parent=35 // pred_fallthru
          _
        // Predicated region
        $region57: #{tpu_custom_call.1} parent=35 // pred_check
          %p1000 = pneg %p196
        $region58: #{tpu_custom_call.1} parent=35 // pred_check_branch
          %1002 = sbr.rel (%p1000) target = $region60
        $region59: #{tpu_custom_call.1} parent=35 // pred_region
          %s1003 = ssub.s32 2, %s34
          %s1004 = smul.u32 4, %s1003
          %s1006 = ssub.s32 512, 512
          %1007 = vsyncadd %s979, %s1006
          %s1008 = sadd.s32 %s33, %s1004
          %s1009 = smul.addr %s1008, 128
          %s1010 = scalar_lea.hbm %s5, %s1009
          %s1011 = sshll.u32 %s982, 4
          %s1012 = int_to_ptr.vmem [resolvable:$true] %s1011
          %1017 = dma.vmem_to_hbm [thread:$0]  %s1012, 512, %s1010, %s979, 128, 128, 8
        $region60: #{tpu_custom_call.1} parent=35 // pred_fallthru
          _
      $region36: #{tpu_custom_call.1} parent=5 // pred_fallthru
        _
      %p1018 = scmp.le.s32.totalorder 2, %s24
      // Predicated region
      $region61: #{tpu_custom_call.1} parent=5 // pred_check
        %p1019 = pneg %p1018
      $region62: #{tpu_custom_call.1} parent=5 // pred_check_branch
        %1021 = sbr.rel (%p1019) target = $region64
      $region63: #{tpu_custom_call.1} parent=5 // pred_region
        %s1022 = ssub.s32 %s24, 2
        // Predicated region
        $region65: #{tpu_custom_call.1} parent=63 // pred_check
          %p1023 = pneg %p172
        $region66: #{tpu_custom_call.1} parent=63 // pred_check_branch
          %1025 = sbr.rel (%p1023) target = $region68
        $region67: #{tpu_custom_call.1} parent=63 // pred_region
          %s1026 = sand.u32 %s157, 1
          %s1027 = scalar_lea.sflag [#allocation6], %s1026
          %s1028 = sand.u32 %s157, 1
          %s1029 = smul.addr %s1028, 32
          %s1030 = scalar_lea.vmem [#allocation10], %s1029
          %1031 = dma.done %s1027, 512
        $region68: #{tpu_custom_call.1} parent=63 // pred_fallthru
          _
        // Predicated region
        $region69: #{tpu_custom_call.1} parent=63 // pred_check
          %p1032 = pneg %p202
        $region70: #{tpu_custom_call.1} parent=63 // pred_check_branch
          %1034 = sbr.rel (%p1032) target = $region72
        $region71: #{tpu_custom_call.1} parent=63 // pred_region
          %s1035 = sand.u32 %s187, 1
          %s1036 = scalar_lea.sflag [#allocation12], %s1035
          %s1037 = sand.u32 %s187, 1
          %s1038 = smul.addr %s1037, 32
          %s1039 = scalar_lea.vmem [#allocation11], %s1038
          %1040 = dma.done %s1036, 512
        $region72: #{tpu_custom_call.1} parent=63 // pred_fallthru
          _
      $region64: #{tpu_custom_call.1} parent=5 // pred_fallthru
        _
    $region6: #{tpu_custom_call.1} parent=1 // loop_footer
      %s28 = sadd.s32 1, %s24
    $region7: #{tpu_custom_call.1} parent=1 // loop_footer_branch
      %23 = sbr.rel target = $region3
    $region8: #{tpu_custom_call.1} parent=1 // loop_exit
      _
    %1041 = vsyncpa [#allocation5], 1
    %s1042 = scalar_lea.sflag [#allocation5], 1
    %1043 = vsyncpa %s1042, 1
    %1044 = vsyncpa [#allocation8], 1
    %s1045 = scalar_lea.sflag [#allocation8], 1
    %1046 = vsyncpa %s1045, 1
    %1047 = vsyncpa [#allocation6], 1
    %s1048 = scalar_lea.sflag [#allocation6], 1
    %1049 = vsyncpa %s1048, 1
    %1050 = vsyncpa [#allocation12], 1
    %s1051 = scalar_lea.sflag [#allocation12], 1
    %1052 = vsyncpa %s1051, 1

</llo_original>
